<compile_context>
chip_gen: v7x
topology: tpu7x:2x2x1
jax: 0.10.0
libtpu: 0.0.40
codegen_flags: <defaults>
</compile_context>

<pallas_src>
import functools
import math

import jax
import jax.numpy as jnp
from jax.experimental import pallas as pl
from jax.experimental.pallas import tpu as pltpu

VMEM_SPEC = pl.BlockSpec(memory_space=pltpu.MemorySpace.VMEM)


# --------------------------------------------------------------------------
# Kernel 1: adjacency-learner dense scores  A = sigmoid(a2 * M1 @ M2.T)
# --------------------------------------------------------------------------
def _adj_scores_kernel(x_ref, wc_ref, bc_ref, a_ref, *, alpha1, alpha2, half):
    # lin1 & lin2 fused into one matmul: weights are concatenated and zero-padded to
    # 2*half lanes in the wrapper. The zero-padded columns give tanh(0) = 0 and therefore
    # contribute nothing to the contraction below, so no slice back to the true dim.
    x = x_ref[...]                                                       # (N, xd) f32
    m = jnp.tanh(alpha1 * (jnp.dot(x, wc_ref[...],
                                   preferred_element_type=jnp.float32) + bc_ref[...]))
    m1 = m[:, :half]
    m2 = m[:, half:]
    # trans_b-style matmul: contract last dims, no explicit transpose of m2.
    logits = alpha2 * jax.lax.dot_general(
        m1, m2, dimension_numbers=(((1,), (1,)), ((), ())),
        preferred_element_type=jnp.float32)
    # Output last dim is N (<128) -> masked partial store; accepted micro-cost at N=16.
    a_ref[...] = jax.nn.sigmoid(logits)


def adj_scores(static_feats, wc, bc, *, half, alpha1=0.1, alpha2=2.0):
    n = static_feats.shape[0]
    kern = functools.partial(_adj_scores_kernel, alpha1=alpha1, alpha2=alpha2, half=half)
    return pl.pallas_call(
        kern,
        out_shape=jax.ShapeDtypeStruct((n, n), jnp.float32),
        in_specs=[VMEM_SPEC] * 3,
        out_specs=VMEM_SPEC,
    )(static_feats, wc, bc)


# --------------------------------------------------------------------------
# Kernel 2: fused [edge mask + self-loop clamp -> L x GraphConvolution -> JK mean-pool -> MLP]
# --------------------------------------------------------------------------
def _make_fused_kernel(batch, num_nodes, residuals, eps=1e-5):
    B, N = batch, num_nodes
    L = len(residuals)

    def kernel(*refs):
        a_ref, mask_ref, x_ref, tile_ref, blk_ref, pool_ref = refs[:6]
        layer_refs = refs[6:6 + 4 * L]              # per layer: w, gamma, beta, mw1_slice
        mb1_ref, mw2_ref, mb2_ref = refs[6 + 4 * L: 9 + 4 * L]
        o_ref = refs[9 + 4 * L]

        # --- adjacency: top-k edge mask multiply + self-loop clamp, folded in-kernel ---
        a = a_ref[...] * mask_ref[...]
        rn = jax.lax.broadcasted_iota(jnp.int32, (N, N), 0)
        cn = jax.lax.broadcasted_iota(jnp.int32, (N, N), 1)
        a = jnp.where(rn == cn, jnp.maximum(a, 0.5), a)

        # --- block-diagonal expansion (built ONCE, before the layer loop) ---
        # tile_ref (B*N, N) tiles A to (B*N, B*N) via two tiny MXU matmuls; blk_ref zeroes
        # the off-diagonal blocks. Every layer's aggregation is then a single MXU push.
        a_tiled = jnp.dot(tile_ref[...], a, preferred_element_type=jnp.float32)  # (B*N, N)
        a_tiled = jax.lax.dot_general(
            a_tiled, tile_ref[...], dimension_numbers=(((1,), (1,)), ((), ())),
            preferred_element_type=jnp.float32)                                   # (B*N, B*N)
        a_blk = (blk_ref[...] * a_tiled).astype(jnp.bfloat16)
        pool = pool_ref[...].astype(jnp.bfloat16)     # (B, B*N): 1/N on each batch block

        h = x_ref[...]                                # (B*N, Fin) f32, batch folded into rows
        acc = jnp.zeros((B, mb1_ref.shape[-1]), jnp.float32)   # readout pre-activation
        inv_bn = 1.0 / float(B * N)

        for l in range(L):
            w_ref, g_ref, bt_ref, mw1_ref = layer_refs[4 * l: 4 * l + 4]

            # support = X @ W over all B*N rows (one push), then block-diag aggregation
            support = jnp.dot(h.astype(jnp.bfloat16), w_ref[...].astype(jnp.bfloat16),
                              preferred_element_type=jnp.float32)          # (B*N, Fout)
            hn = jnp.dot(a_blk, support.astype(jnp.bfloat16),
                         preferred_element_type=jnp.float32)               # (B*N, Fout)
            # (per-layer bias dropped: a per-feature constant cancels exactly in the BN below)

            # BatchNorm1d (training-mode stats over batch*nodes), two-pass for numerics.
            mean = jnp.sum(hn, axis=0, keepdims=True) * inv_bn
            cen = hn - mean
            var = jnp.sum(cen * cen, axis=0, keepdims=True) * inv_bn
            hn = cen * jax.lax.rsqrt(var + eps) * g_ref[...] + bt_ref[...]

            # ELU (alpha=1); clamp exp argument so the unselected branch never hits inf.
            # TODO(synk): jnp.expm1 would be marginally more accurate near 0.
            hn = jnp.where(hn > 0, hn, jnp.exp(jnp.minimum(hn, 0.0)) - 1.0)

            if residuals[l]:
                hn = h + hn
            # dropout p=0.0 -> identity

            # jumping-knowledge readout: node mean-pool on the MXU, folded into the
            # matching mlp_w1 row block (the feature concat never materializes).
            e_mean = jnp.dot(pool, hn.astype(jnp.bfloat16),
                             preferred_element_type=jnp.float32)           # (B, Fout)
            acc = acc + jnp.dot(e_mean.astype(jnp.bfloat16),
                                mw1_ref[...].astype(jnp.bfloat16),
                                preferred_element_type=jnp.float32)

            h = hn

        # readout MLP: Linear -> ReLU -> Linear; final weights lane-padded to 128 so the
        # only store of this kernel is a full, unmasked lane-dense write.
        g1 = jnp.maximum(acc + mb1_ref[...], 0.0)
        o_ref[...] = jnp.dot(g1.astype(jnp.bfloat16), mw2_ref[...].astype(jnp.bfloat16),
                             preferred_element_type=jnp.float32) + mb2_ref[...]

    return kernel


# --------------------------------------------------------------------------
# Parameter preparation (hoisted out of the per-step hot path)
# --------------------------------------------------------------------------
def prepare_params(params, *, batch, num_nodes):
    """Pre-fold every input-constant transform (weight concat/pad, mlp_w1 row slices,
    lane-padding of the final MLP layer, the constant tiling / block-mask / pooling
    matrices) so the jitted forward is just two pallas_calls plus the top-k glue."""
    adim = params['adj_w1'].shape[1]
    half = 64 * pl.cdiv(adim, 64)         # pad each adjacency-learner half -> lane-dense 2*half

    def _pad_cols(w):
        return jnp.pad(w, ((0, 0), (0, half - adim)))

    adj_wc = jnp.concatenate([_pad_cols(params['adj_w1']), _pad_cols(params['adj_w2'])], axis=1)
    adj_bc = jnp.concatenate([_pad_cols(params['adj_b1']), _pad_cols(params['adj_b2'])], axis=1)

    layers = params['layers']             # list of (w, b, gamma, beta)
    # GraphConvolution disables residual when in_features != out_features
    residuals = tuple(int(w.shape[0]) == int(w.shape[1]) for (w, _, _, _) in layers)

    # split mlp_w1 into per-layer row blocks (jumping-knowledge as a sum of slice matmuls)
    mw1 = params['mlp_w1']
    prepped_layers, off = [], 0
    for (w, _b, g, bt) in layers:         # _b (pre-BN bias) cancels exactly in BatchNorm
        fo = w.shape[1]
        prepped_layers.append((w, g, bt, mw1[off:off + fo, :]))
        off += fo
    assert off == mw1.shape[0]

    # lane-pad the final MLP layer to a multiple of 128; padding sliced off after the kernel
    n_out = params['mlp_w2'].shape[1]
    n_pad = 128 * pl.cdiv(n_out, 128)
    mw2 = jnp.pad(params['mlp_w2'], ((0, 0), (0, n_pad - n_out)))
    mb2 = jnp.pad(params['mlp_b2'], ((0, 0), (0, n_pad - n_out)))

    # constant tiling / block-mask / mean-pool matrices (depend only on B, N)
    B, N = batch, num_nodes
    eye = jnp.eye(N, dtype=jnp.float32)
    tile_mat = jnp.concatenate([eye] * B, axis=0)                            # (B*N, N)
    blk_ids = jnp.repeat(jnp.arange(B), N)
    blk_mask = (blk_ids[:, None] == blk_ids[None, :]).astype(jnp.float32)    # (B*N, B*N)
    pool = jnp.transpose(jax.nn.one_hot(blk_ids, B, dtype=jnp.float32)) / N  # (B, B*N)

    prep = dict(
        adj_static=params['adj_static'], adj_wc=adj_wc, adj_bc=adj_bc,
        layers=prepped_layers, mlp_b1=params['mlp_b1'], mlp_w2=mw2, mlp_b2=mb2,
        tile_mat=tile_mat, blk_mask=blk_mask, pool=pool,
    )
    meta = dict(residuals=residuals, n_out=int(n_out), adj_half=int(half))
    return prep, meta


# --------------------------------------------------------------------------
# Full GCN forward
# --------------------------------------------------------------------------
def gcn_forward(x, prep, *, num_edges, residuals, n_out, adj_half):
    B, N, fin = x.shape

    # adjacency-learner scores (Pallas, f32) + top-k edge mask (XLA glue)
    a_scores = adj_scores(prep['adj_static'], prep['adj_wc'], prep['adj_bc'], half=adj_half)
    # TODO(synk): no clean in-kernel top-k; a k-th-value threshold would change tie-breaking
    #             vs torch.topk, so keep the explicit top_k + mask scatter in XLA.
    a_flat = a_scores.reshape(-1)
    _, idx = jax.lax.top_k(a_flat, num_edges)
    mask = jnp.zeros_like(a_flat).at[idx].set(1.0).reshape(N, N)
    # the a*mask multiply and the self-loop clamp happen inside the fused kernel below

    flat_args = [a_scores, mask, x.reshape(B * N, fin),
                 prep['tile_mat'], prep['blk_mask'], prep['pool']]
    for (w, g, bt, mw1_l) in prep['layers']:
        flat_args += [w, g, bt, mw1_l]
    flat_args += [prep['mlp_b1'], prep['mlp_w2'], prep['mlp_b2']]

    n_pad = prep['mlp_w2'].shape[1]
    out = pl.pallas_call(
        _make_fused_kernel(B, N, residuals),
        out_shape=jax.ShapeDtypeStruct((B, n_pad), jnp.float32),
        in_specs=[VMEM_SPEC] * len(flat_args),
        out_specs=VMEM_SPEC,
        # Everything (A, weights, activations) is VMEM-resident (KBs here); the explicit
        # limit just documents the scale-up knob (v5e scoped default is only 16 MiB).
        compiler_params=pltpu.CompilerParams(vmem_limit_bytes=32 * 1024 * 1024),
    )(*flat_args)
    # TODO(synk): add a parallel grid over batch/node tiles (dimension_semantics) before
    #             B or N grow enough to matter on v7x (2 TCs, 64 MiB VMEM per TC).

    # torch .squeeze(1) is a no-op here (dim 1 has size num_nodes != 1)
    return out[:, :n_out]


# --------------------------------------------------------------------------
# Deterministic parameter construction + run
# --------------------------------------------------------------------------
def _uniform(key, shape, scale):
    return jax.random.uniform(key, shape, jnp.float32, -scale, scale)


if __name__ == "__main__":
    key = jax.random.PRNGKey(0)

    B, N = 2, 16                  # batch, num_nodes
    FIN, HID, L = 8, 32, 3        # in_features, hidden_dim, num_layer
    OUT_DIM = 100                 # hard-coded in GCN.__init__
    XD, ADIM = 12, 50             # static-feature dim, adjacency-learner dim
    NUM_EDGES = 8 * N             # max_num_edges = 8 * num_nodes

    keys = jax.random.split(key, 32)
    ki = iter(range(32))

    # adjacency learner (nn.Linear(xd, 50) x 2) + static features
    adj_static = jax.random.normal(keys[next(ki)], (N, XD), jnp.float32)
    s = 1.0 / math.sqrt(XD)
    adj_w1 = _uniform(keys[next(ki)], (XD, ADIM), s)
    adj_b1 = _uniform(keys[next(ki)], (1, ADIM), s)
    adj_w2 = _uniform(keys[next(ki)], (XD, ADIM), s)
    adj_b2 = _uniform(keys[next(ki)], (1, ADIM), s)

    # GraphConvolution layers: in->hid, hid->hid (L-2 times), hid->100
    dims = [(FIN, HID)] + [(HID, HID)] * (L - 2) + [(HID, OUT_DIM)]
    layers = []
    for fin, fout in dims:
        stdv = 1.0 / math.sqrt(fout)
        w = _uniform(keys[next(ki)], (fin, fout), stdv)
        b = _uniform(keys[next(ki)], (1, fout), stdv)   # cancels exactly in the layer's BN
        gamma = jnp.ones((1, fout), jnp.float32)
        beta = jnp.zeros((1, fout), jnp.float32)
        layers.append((w, b, gamma, beta))

    # MLP readout: jumping-knowledge dim -> [num_nodes] -> num_nodes
    # TODO(synk): MLP class definition not provided in the source; assumed
    #             MLP(in, out, [hidden]) = Linear -> ReLU -> Linear.
    mlp_in = OUT_DIM + HID * (L - 1)
    s1 = 1.0 / math.sqrt(mlp_in)
    s2 = 1.0 / math.sqrt(N)
    mlp_w1 = _uniform(keys[next(ki)], (mlp_in, N), s1)
    mlp_b1 = _uniform(keys[next(ki)], (1, N), s1)
    mlp_w2 = _uniform(keys[next(ki)], (N, N), s2)
    mlp_b2 = _uniform(keys[next(ki)], (1, N), s2)

    params = dict(
        adj_static=adj_static, adj_w1=adj_w1, adj_b1=adj_b1,
        adj_w2=adj_w2, adj_b2=adj_b2,
        layers=layers,
        mlp_w1=mlp_w1, mlp_b1=mlp_b1, mlp_w2=mlp_w2, mlp_b2=mlp_b2,
    )

    x = jax.random.normal(keys[next(ki)], (B, N, FIN), jnp.float32)

    # constant-folding prep hoisted out of the per-step forward
    prep, meta = prepare_params(params, batch=B, num_nodes=N)

    fwd = jax.jit(functools.partial(gcn_forward, num_edges=NUM_EDGES, **meta))
    out = fwd(x, prep)
    out = jax.block_until_ready(out)
    assert out.shape == (B, N), out.shape
    assert jnp.all(jnp.isfinite(out))
    print("KERNEL_OK")
</pallas_src>

<mosaic_0001>
module attributes {stable_mosaic.version = 11 : i64} {
  func.func @_adj_scores_kernel(%arg0: memref<16x12xf32, #tpu.memory_space<vmem>>, %arg1: memref<12x128xf32, #tpu.memory_space<vmem>>, %arg2: memref<1x128xf32, #tpu.memory_space<vmem>>, %arg3: memref<16x16xf32, #tpu.memory_space<vmem>>) attributes {dimension_semantics = [], scalar_prefetch = 0 : i64, scratch_operands = 0 : i64, tpu.core_type = #tpu.core_type<tc>} {
    %c0 = arith.constant 0 : index
    %c0_0 = arith.constant 0 : index
    %0 = vector.load %arg0[%c0, %c0_0] : memref<16x12xf32, #tpu.memory_space<vmem>>, vector<16x12xf32>
    %c0_1 = arith.constant 0 : index
    %c0_2 = arith.constant 0 : index
    %1 = vector.load %arg1[%c0_1, %c0_2] : memref<12x128xf32, #tpu.memory_space<vmem>>, vector<12x128xf32>
    %cst = arith.constant dense<0.000000e+00> : vector<16x128xf32>
    %2 = tpu.matmul %0, %1, %cst {dimension_numbers = #tpu.dot_dimension_numbers<[1], [0], [0], [1], [0, 0, 1, 1], [], []>} : vector<16x12xf32>, vector<12x128xf32>, vector<16x128xf32> -> vector<16x128xf32>
    %c0_3 = arith.constant 0 : index
    %c0_4 = arith.constant 0 : index
    %3 = vector.load %arg2[%c0_3, %c0_4] : memref<1x128xf32, #tpu.memory_space<vmem>>, vector<1x128xf32>
    %4 = vector.broadcast %3 : vector<1x128xf32> to vector<16x128xf32>
    %5 = arith.addf %2, %4 : vector<16x128xf32>
    %cst_5 = arith.constant 1.000000e-01 : f32
    %6 = vector.broadcast %cst_5 : f32 to vector<16x128xf32>
    %7 = arith.mulf %6, %5 : vector<16x128xf32>
    %8 = math.tanh %7 : vector<16x128xf32>
    %9 = vector.extract_strided_slice %8 {offsets = [0, 0], sizes = [16, 64], strides = [1, 1]} : vector<16x128xf32> to vector<16x64xf32>
    %10 = vector.extract_strided_slice %8 {offsets = [0, 64], sizes = [16, 64], strides = [1, 1]} : vector<16x128xf32> to vector<16x64xf32>
    %cst_6 = arith.constant dense<0.000000e+00> : vector<16x16xf32>
    %11 = tpu.matmul %9, %10, %cst_6 {dimension_numbers = #tpu.dot_dimension_numbers<[1], [1], [0], [0], [0, 0, 1, 0], [], []>} : vector<16x64xf32>, vector<16x64xf32>, vector<16x16xf32> -> vector<16x16xf32>
    %cst_7 = arith.constant 2.000000e+00 : f32
    %12 = vector.broadcast %cst_7 : f32 to vector<16x16xf32>
    %13 = arith.mulf %12, %11 : vector<16x16xf32>
    %14 = arith.negf %13 : vector<16x16xf32>
    %15 = math.exp %14 : vector<16x16xf32>
    %cst_8 = arith.constant 1.000000e+00 : f32
    %16 = vector.broadcast %cst_8 : f32 to vector<16x16xf32>
    %17 = arith.addf %16, %15 : vector<16x16xf32>
    %18 = arith.divf %16, %17 : vector<16x16xf32>
    %c0_9 = arith.constant 0 : index
    %c0_10 = arith.constant 0 : index
    %19 = vector.load %arg3[%c0_9, %c0_10] : memref<16x16xf32, #tpu.memory_space<vmem>>, vector<16x16xf32>
    tpu.vector_store %arg3[%c0_9, %c0_10], %18 {strides = array<i32>} : memref<16x16xf32, #tpu.memory_space<vmem>>, vector<16x16xf32>,
    return
  }
}

module attributes {stable_mosaic.version = 11 : i64} {
  func.func @kernel(%arg0: memref<16x16xf32, #tpu.memory_space<vmem>>, %arg1: memref<16x16xf32, #tpu.memory_space<vmem>>, %arg2: memref<32x8xf32, #tpu.memory_space<vmem>>, %arg3: memref<32x16xf32, #tpu.memory_space<vmem>>, %arg4: memref<32x32xf32, #tpu.memory_space<vmem>>, %arg5: memref<2x32xf32, #tpu.memory_space<vmem>>, %arg6: memref<8x32xf32, #tpu.memory_space<vmem>>, %arg7: memref<1x32xf32, #tpu.memory_space<vmem>>, %arg8: memref<1x32xf32, #tpu.memory_space<vmem>>, %arg9: memref<32x16xf32, #tpu.memory_space<vmem>>, %arg10: memref<32x32xf32, #tpu.memory_space<vmem>>, %arg11: memref<1x32xf32, #tpu.memory_space<vmem>>, %arg12: memref<1x32xf32, #tpu.memory_space<vmem>>, %arg13: memref<32x16xf32, #tpu.memory_space<vmem>>, %arg14: memref<32x100xf32, #tpu.memory_space<vmem>>, %arg15: memref<1x100xf32, #tpu.memory_space<vmem>>, %arg16: memref<1x100xf32, #tpu.memory_space<vmem>>, %arg17: memref<100x16xf32, #tpu.memory_space<vmem>>, %arg18: memref<1x16xf32, #tpu.memory_space<vmem>>, %arg19: memref<16x128xf32, #tpu.memory_space<vmem>>, %arg20: memref<1x128xf32, #tpu.memory_space<vmem>>, %arg21: memref<2x128xf32, #tpu.memory_space<vmem>>) attributes {dimension_semantics = [], scalar_prefetch = 0 : i64, scratch_operands = 0 : i64, tpu.core_type = #tpu.core_type<tc>} {
    %c0 = arith.constant 0 : index
    %c0_0 = arith.constant 0 : index
    %0 = vector.load %arg0[%c0, %c0_0] : memref<16x16xf32, #tpu.memory_space<vmem>>, vector<16x16xf32>
    %c0_1 = arith.constant 0 : index
    %c0_2 = arith.constant 0 : index
    %1 = vector.load %arg1[%c0_1, %c0_2] : memref<16x16xf32, #tpu.memory_space<vmem>>, vector<16x16xf32>
    %2 = arith.mulf %0, %1 : vector<16x16xf32>
    %3 = tpu.iota {dimensions = array<i32: 0>} : vector<16x16xi32>
    %4 = tpu.iota {dimensions = array<i32: 1>} : vector<16x16xi32>
    %5 = arith.cmpi eq, %3, %4 : vector<16x16xi32>
    %cst = arith.constant 5.000000e-01 : f32
    %6 = vector.broadcast %cst : f32 to vector<16x16xf32>
    %7 = arith.maximumf %2, %6 : vector<16x16xf32>
    %8 = arith.select %5, %7, %2 : vector<16x16xi1>, vector<16x16xf32>
    %c0_3 = arith.constant 0 : index
    %c0_4 = arith.constant 0 : index
    %9 = vector.load %arg3[%c0_3, %c0_4] : memref<32x16xf32, #tpu.memory_space<vmem>>, vector<32x16xf32>
    %cst_5 = arith.constant dense<0.000000e+00> : vector<32x16xf32>
    %10 = tpu.matmul %9, %8, %cst_5 {dimension_numbers = #tpu.dot_dimension_numbers<[1], [0], [0], [1], [0, 0, 1, 1], [], []>} : vector<32x16xf32>, vector<16x16xf32>, vector<32x16xf32> -> vector<32x16xf32>
    %c0_6 = arith.constant 0 : index
    %c0_7 = arith.constant 0 : index
    %11 = vector.load %arg3[%c0_6, %c0_7] : memref<32x16xf32, #tpu.memory_space<vmem>>, vector<32x16xf32>
    %cst_8 = arith.constant dense<0.000000e+00> : vector<32x32xf32>
    %12 = tpu.matmul %10, %11, %cst_8 {dimension_numbers = #tpu.dot_dimension_numbers<[1], [1], [0], [0], [0, 0, 1, 0], [], []>} : vector<32x16xf32>, vector<32x16xf32>, vector<32x32xf32> -> vector<32x32xf32>
    %c0_9 = arith.constant 0 : index
    %c0_10 = arith.constant 0 : index
    %13 = vector.load %arg4[%c0_9, %c0_10] : memref<32x32xf32, #tpu.memory_space<vmem>>, vector<32x32xf32>
    %14 = arith.mulf %13, %12 : vector<32x32xf32>
    %15 = arith.truncf %14 : vector<32x32xf32> to vector<32x32xbf16>
    %c0_11 = arith.constant 0 : index
    %c0_12 = arith.constant 0 : index
    %16 = vector.load %arg5[%c0_11, %c0_12] : memref<2x32xf32, #tpu.memory_space<vmem>>, vector<2x32xf32>
    %17 = arith.truncf %16 : vector<2x32xf32> to vector<2x32xbf16>
    %c0_13 = arith.constant 0 : index
    %c0_14 = arith.constant 0 : index
    %18 = vector.load %arg2[%c0_13, %c0_14] : memref<32x8xf32, #tpu.memory_space<vmem>>, vector<32x8xf32>
    %cst_15 = arith.constant 0.000000e+00 : f32
    %19 = vector.broadcast %cst_15 : f32 to vector<2x16xf32>
    %20 = arith.truncf %18 : vector<32x8xf32> to vector<32x8xbf16>
    %c0_16 = arith.constant 0 : index
    %c0_17 = arith.constant 0 : index
    %21 = vector.load %arg6[%c0_16, %c0_17] : memref<8x32xf32, #tpu.memory_space<vmem>>, vector<8x32xf32>
    %22 = arith.truncf %21 : vector<8x32xf32> to vector<8x32xbf16>
    %cst_18 = arith.constant dense<0.000000e+00> : vector<32x32xf32>
    %23 = tpu.matmul %20, %22, %cst_18 {dimension_numbers = #tpu.dot_dimension_numbers<[1], [0], [0], [1], [0, 0, 1, 1], [], []>} : vector<32x8xbf16>, vector<8x32xbf16>, vector<32x32xf32> -> vector<32x32xf32>
    %24 = arith.truncf %23 : vector<32x32xf32> to vector<32x32xbf16>
    %cst_19 = arith.constant dense<0.000000e+00> : vector<32x32xf32>
    %25 = tpu.matmul %15, %24, %cst_19 {dimension_numbers = #tpu.dot_dimension_numbers<[1], [0], [0], [1], [0, 0, 1, 1], [], []>} : vector<32x32xbf16>, vector<32x32xbf16>, vector<32x32xf32> -> vector<32x32xf32>
    %cst_20 = arith.constant dense<0.000000e+00> : vector<32xf32>
    %26 = vector.multi_reduction <add>, %25, %cst_20 [0] : vector<32x32xf32> to vector<32xf32>
    %27 = vector.shape_cast %26 : vector<32xf32> to vector<1x32xf32>
    %cst_21 = arith.constant 3.125000e-02 : f32
    %28 = vector.broadcast %cst_21 : f32 to vector<1x32xf32>
    %29 = arith.mulf %27, %28 : vector<1x32xf32>
    %30 = vector.broadcast %29 : vector<1x32xf32> to vector<32x32xf32>
    %31 = arith.subf %25, %30 : vector<32x32xf32>
    %32 = arith.mulf %31, %31 : vector<32x32xf32>
    %cst_22 = arith.constant dense<0.000000e+00> : vector<32xf32>
    %33 = vector.multi_reduction <add>, %32, %cst_22 [0] : vector<32x32xf32> to vector<32xf32>
    %34 = vector.shape_cast %33 : vector<32xf32> to vector<1x32xf32>
    %cst_23 = arith.constant 3.125000e-02 : f32
    %35 = vector.broadcast %cst_23 : f32 to vector<1x32xf32>
    %36 = arith.mulf %34, %35 : vector<1x32xf32>
    %cst_24 = arith.constant 9.99999974E-6 : f32
    %37 = vector.broadcast %cst_24 : f32 to vector<1x32xf32>
    %38 = arith.addf %36, %37 : vector<1x32xf32>
    %39 = math.rsqrt %38 : vector<1x32xf32>
    %40 = vector.broadcast %39 : vector<1x32xf32> to vector<32x32xf32>
    %41 = arith.mulf %31, %40 : vector<32x32xf32>
    %c0_25 = arith.constant 0 : index
    %c0_26 = arith.constant 0 : index
    %42 = vector.load %arg7[%c0_25, %c0_26] : memref<1x32xf32, #tpu.memory_space<vmem>>, vector<1x32xf32>
    %43 = vector.broadcast %42 : vector<1x32xf32> to vector<32x32xf32>
    %44 = arith.mulf %41, %43 : vector<32x32xf32>
    %c0_27 = arith.constant 0 : index
    %c0_28 = arith.constant 0 : index
    %45 = vector.load %arg8[%c0_27, %c0_28] : memref<1x32xf32, #tpu.memory_space<vmem>>, vector<1x32xf32>
    %46 = vector.broadcast %45 : vector<1x32xf32> to vector<32x32xf32>
    %47 = arith.addf %44, %46 : vector<32x32xf32>
    %cst_29 = arith.constant 0.000000e+00 : f32
    %48 = vector.broadcast %cst_29 : f32 to vector<32x32xf32>
    %49 = arith.cmpf ogt, %47, %48 : vector<32x32xf32>
    %cst_30 = arith.constant 0.000000e+00 : f32
    %50 = vector.broadcast %cst_30 : f32 to vector<32x32xf32>
    %51 = arith.minimumf %47, %50 : vector<32x32xf32>
    %52 = math.exp %51 : vector<32x32xf32>
    %cst_31 = arith.constant 1.000000e+00 : f32
    %53 = vector.broadcast %cst_31 : f32 to vector<32x32xf32>
    %54 = arith.subf %52, %53 : vector<32x32xf32>
    %55 = arith.select %49, %47, %54 : vector<32x32xi1>, vector<32x32xf32>
    %56 = arith.truncf %55 : vector<32x32xf32> to vector<32x32xbf16>
    %cst_32 = arith.constant dense<0.000000e+00> : vector<2x32xf32>
    %57 = tpu.matmul %17, %56, %cst_32 {dimension_numbers = #tpu.dot_dimension_numbers<[1], [0], [0], [1], [0, 0, 1, 1], [], []>} : vector<2x32xbf16>, vector<32x32xbf16>, vector<2x32xf32> -> vector<2x32xf32>
    %58 = arith.truncf %57 : vector<2x32xf32> to vector<2x32xbf16>
    %c0_33 = arith.constant 0 : index
    %c0_34 = arith.constant 0 : index
    %59 = vector.load %arg9[%c0_33, %c0_34] : memref<32x16xf32, #tpu.memory_space<vmem>>, vector<32x16xf32>
    %60 = arith.truncf %59 : vector<32x16xf32> to vector<32x16xbf16>
    %cst_35 = arith.constant dense<0.000000e+00> : vector<2x16xf32>
    %61 = tpu.matmul %58, %60, %cst_35 {dimension_numbers = #tpu.dot_dimension_numbers<[1], [0], [0], [1], [0, 0, 1, 1], [], []>} : vector<2x32xbf16>, vector<32x16xbf16>, vector<2x16xf32> -> vector<2x16xf32>
    %62 = arith.addf %19, %61 : vector<2x16xf32>
    %63 = arith.truncf %55 : vector<32x32xf32> to vector<32x32xbf16>
    %c0_36 = arith.constant 0 : index
    %c0_37 = arith.constant 0 : index
    %64 = vector.load %arg10[%c0_36, %c0_37] : memref<32x32xf32, #tpu.memory_space<vmem>>, vector<32x32xf32>
    %65 = arith.truncf %64 : vector<32x32xf32> to vector<32x32xbf16>
    %cst_38 = arith.constant dense<0.000000e+00> : vector<32x32xf32>
    %66 = tpu.matmul %63, %65, %cst_38 {dimension_numbers = #tpu.dot_dimension_numbers<[1], [0], [0], [1], [0, 0, 1, 1], [], []>} : vector<32x32xbf16>, vector<32x32xbf16>, vector<32x32xf32> -> vector<32x32xf32>
    %67 = arith.truncf %66 : vector<32x32xf32> to vector<32x32xbf16>
    %cst_39 = arith.constant dense<0.000000e+00> : vector<32x32xf32>
    %68 = tpu.matmul %15, %67, %cst_39 {dimension_numbers = #tpu.dot_dimension_numbers<[1], [0], [0], [1], [0, 0, 1, 1], [], []>} : vector<32x32xbf16>, vector<32x32xbf16>, vector<32x32xf32> -> vector<32x32xf32>
    %cst_40 = arith.constant dense<0.000000e+00> : vector<32xf32>
    %69 = vector.multi_reduction <add>, %68, %cst_40 [0] : vector<32x32xf32> to vector<32xf32>
    %70 = vector.shape_cast %69 : vector<32xf32> to vector<1x32xf32>
    %cst_41 = arith.constant 3.125000e-02 : f32
    %71 = vector.broadcast %cst_41 : f32 to vector<1x32xf32>
    %72 = arith.mulf %70, %71 : vector<1x32xf32>
    %73 = vector.broadcast %72 : vector<1x32xf32> to vector<32x32xf32>
    %74 = arith.subf %68, %73 : vector<32x32xf32>
    %75 = arith.mulf %74, %74 : vector<32x32xf32>
    %cst_42 = arith.constant dense<0.000000e+00> : vector<32xf32>
    %76 = vector.multi_reduction <add>, %75, %cst_42 [0] : vector<32x32xf32> to vector<32xf32>
    %77 = vector.shape_cast %76 : vector<32xf32> to vector<1x32xf32>
    %cst_43 = arith.constant 3.125000e-02 : f32
    %78 = vector.broadcast %cst_43 : f32 to vector<1x32xf32>
    %79 = arith.mulf %77, %78 : vector<1x32xf32>
    %cst_44 = arith.constant 9.99999974E-6 : f32
    %80 = vector.broadcast %cst_44 : f32 to vector<1x32xf32>
    %81 = arith.addf %79, %80 : vector<1x32xf32>
    %82 = math.rsqrt %81 : vector<1x32xf32>
    %83 = vector.broadcast %82 : vector<1x32xf32> to vector<32x32xf32>
    %84 = arith.mulf %74, %83 : vector<32x32xf32>
    %c0_45 = arith.constant 0 : index
    %c0_46 = arith.constant 0 : index
    %85 = vector.load %arg11[%c0_45, %c0_46] : memref<1x32xf32, #tpu.memory_space<vmem>>, vector<1x32xf32>
    %86 = vector.broadcast %85 : vector<1x32xf32> to vector<32x32xf32>
    %87 = arith.mulf %84, %86 : vector<32x32xf32>
    %c0_47 = arith.constant 0 : index
    %c0_48 = arith.constant 0 : index
    %88 = vector.load %arg12[%c0_47, %c0_48] : memref<1x32xf32, #tpu.memory_space<vmem>>, vector<1x32xf32>
    %89 = vector.broadcast %88 : vector<1x32xf32> to vector<32x32xf32>
    %90 = arith.addf %87, %89 : vector<32x32xf32>
    %cst_49 = arith.constant 0.000000e+00 : f32
    %91 = vector.broadcast %cst_49 : f32 to vector<32x32xf32>
    %92 = arith.cmpf ogt, %90, %91 : vector<32x32xf32>
    %cst_50 = arith.constant 0.000000e+00 : f32
    %93 = vector.broadcast %cst_50 : f32 to vector<32x32xf32>
    %94 = arith.minimumf %90, %93 : vector<32x32xf32>
    %95 = math.exp %94 : vector<32x32xf32>
    %cst_51 = arith.constant 1.000000e+00 : f32
    %96 = vector.broadcast %cst_51 : f32 to vector<32x32xf32>
    %97 = arith.subf %95, %96 : vector<32x32xf32>
    %98 = arith.select %92, %90, %97 : vector<32x32xi1>, vector<32x32xf32>
    %99 = arith.addf %55, %98 : vector<32x32xf32>
    %100 = arith.truncf %99 : vector<32x32xf32> to vector<32x32xbf16>
    %cst_52 = arith.constant dense<0.000000e+00> : vector<2x32xf32>
    %101 = tpu.matmul %17, %100, %cst_52 {dimension_numbers = #tpu.dot_dimension_numbers<[1], [0], [0], [1], [0, 0, 1, 1], [], []>} : vector<2x32xbf16>, vector<32x32xbf16>, vector<2x32xf32> -> vector<2x32xf32>
    %102 = arith.truncf %101 : vector<2x32xf32> to vector<2x32xbf16>
    %c0_53 = arith.constant 0 : index
    %c0_54 = arith.constant 0 : index
    %103 = vector.load %arg13[%c0_53, %c0_54] : memref<32x16xf32, #tpu.memory_space<vmem>>, vector<32x16xf32>
    %104 = arith.truncf %103 : vector<32x16xf32> to vector<32x16xbf16>
    %cst_55 = arith.constant dense<0.000000e+00> : vector<2x16xf32>
    %105 = tpu.matmul %102, %104, %cst_55 {dimension_numbers = #tpu.dot_dimension_numbers<[1], [0], [0], [1], [0, 0, 1, 1], [], []>} : vector<2x32xbf16>, vector<32x16xbf16>, vector<2x16xf32> -> vector<2x16xf32>
    %106 = arith.addf %62, %105 : vector<2x16xf32>
    %107 = arith.truncf %99 : vector<32x32xf32> to vector<32x32xbf16>
    %c0_56 = arith.constant 0 : index
    %c0_57 = arith.constant 0 : index
    %108 = vector.load %arg14[%c0_56, %c0_57] : memref<32x100xf32, #tpu.memory_space<vmem>>, vector<32x100xf32>
    %109 = arith.truncf %108 : vector<32x100xf32> to vector<32x100xbf16>
    %cst_58 = arith.constant dense<0.000000e+00> : vector<32x100xf32>
    %110 = tpu.matmul %107, %109, %cst_58 {dimension_numbers = #tpu.dot_dimension_numbers<[1], [0], [0], [1], [0, 0, 1, 1], [], []>} : vector<32x32xbf16>, vector<32x100xbf16>, vector<32x100xf32> -> vector<32x100xf32>
    %111 = arith.truncf %110 : vector<32x100xf32> to vector<32x100xbf16>
    %cst_59 = arith.constant dense<0.000000e+00> : vector<32x100xf32>
    %112 = tpu.matmul %15, %111, %cst_59 {dimension_numbers = #tpu.dot_dimension_numbers<[1], [0], [0], [1], [0, 0, 1, 1], [], []>} : vector<32x32xbf16>, vector<32x100xbf16>, vector<32x100xf32> -> vector<32x100xf32>
    %cst_60 = arith.constant dense<0.000000e+00> : vector<100xf32>
    %113 = vector.multi_reduction <add>, %112, %cst_60 [0] : vector<32x100xf32> to vector<100xf32>
    %114 = vector.shape_cast %113 : vector<100xf32> to vector<1x100xf32>
    %cst_61 = arith.constant 3.125000e-02 : f32
    %115 = vector.broadcast %cst_61 : f32 to vector<1x100xf32>
    %116 = arith.mulf %114, %115 : vector<1x100xf32>
    %117 = vector.broadcast %116 : vector<1x100xf32> to vector<32x100xf32>
    %118 = arith.subf %112, %117 : vector<32x100xf32>
    %119 = arith.mulf %118, %118 : vector<32x100xf32>
    %cst_62 = arith.constant dense<0.000000e+00> : vector<100xf32>
    %120 = vector.multi_reduction <add>, %119, %cst_62 [0] : vector<32x100xf32> to vector<100xf32>
    %121 = vector.shape_cast %120 : vector<100xf32> to vector<1x100xf32>
    %cst_63 = arith.constant 3.125000e-02 : f32
    %122 = vector.broadcast %cst_63 : f32 to vector<1x100xf32>
    %123 = arith.mulf %121, %122 : vector<1x100xf32>
    %cst_64 = arith.constant 9.99999974E-6 : f32
    %124 = vector.broadcast %cst_64 : f32 to vector<1x100xf32>
    %125 = arith.addf %123, %124 : vector<1x100xf32>
    %126 = math.rsqrt %125 : vector<1x100xf32>
    %127 = vector.broadcast %126 : vector<1x100xf32> to vector<32x100xf32>
    %128 = arith.mulf %118, %127 : vector<32x100xf32>
    %c0_65 = arith.constant 0 : index
    %c0_66 = arith.constant 0 : index
    %129 = vector.load %arg15[%c0_65, %c0_66] : memref<1x100xf32, #tpu.memory_space<vmem>>, vector<1x100xf32>
    %130 = vector.broadcast %129 : vector<1x100xf32> to vector<32x100xf32>
    %131 = arith.mulf %128, %130 : vector<32x100xf32>
    %c0_67 = arith.constant 0 : index
    %c0_68 = arith.constant 0 : index
    %132 = vector.load %arg16[%c0_67, %c0_68] : memref<1x100xf32, #tpu.memory_space<vmem>>, vector<1x100xf32>
    %133 = vector.broadcast %132 : vector<1x100xf32> to vector<32x100xf32>
    %134 = arith.addf %131, %133 : vector<32x100xf32>
    %cst_69 = arith.constant 0.000000e+00 : f32
    %135 = vector.broadcast %cst_69 : f32 to vector<32x100xf32>
    %136 = arith.cmpf ogt, %134, %135 : vector<32x100xf32>
    %cst_70 = arith.constant 0.000000e+00 : f32
    %137 = vector.broadcast %cst_70 : f32 to vector<32x100xf32>
    %138 = arith.minimumf %134, %137 : vector<32x100xf32>
    %139 = math.exp %138 : vector<32x100xf32>
    %cst_71 = arith.constant 1.000000e+00 : f32
    %140 = vector.broadcast %cst_71 : f32 to vector<32x100xf32>
    %141 = arith.subf %139, %140 : vector<32x100xf32>
    %142 = arith.select %136, %134, %141 : vector<32x100xi1>, vector<32x100xf32>
    %143 = arith.truncf %142 : vector<32x100xf32> to vector<32x100xbf16>
    %cst_72 = arith.constant dense<0.000000e+00> : vector<2x100xf32>
    %144 = tpu.matmul %17, %143, %cst_72 {dimension_numbers = #tpu.dot_dimension_numbers<[1], [0], [0], [1], [0, 0, 1, 1], [], []>} : vector<2x32xbf16>, vector<32x100xbf16>, vector<2x100xf32> -> vector<2x100xf32>
    %145 = arith.truncf %144 : vector<2x100xf32> to vector<2x100xbf16>
    %c0_73 = arith.constant 0 : index
    %c0_74 = arith.constant 0 : index
    %146 = vector.load %arg17[%c0_73, %c0_74] : memref<100x16xf32, #tpu.memory_space<vmem>>, vector<100x16xf32>
    %147 = arith.truncf %146 : vector<100x16xf32> to vector<100x16xbf16>
    %cst_75 = arith.constant dense<0.000000e+00> : vector<2x16xf32>
    %148 = tpu.matmul %145, %147, %cst_75 {dimension_numbers = #tpu.dot_dimension_numbers<[1], [0], [0], [1], [0, 0, 1, 1], [], []>} : vector<2x100xbf16>, vector<100x16xbf16>, vector<2x16xf32> -> vector<2x16xf32>
    %149 = arith.addf %106, %148 : vector<2x16xf32>
    %c0_76 = arith.constant 0 : index
    %c0_77 = arith.constant 0 : index
    %150 = vector.load %arg18[%c0_76, %c0_77] : memref<1x16xf32, #tpu.memory_space<vmem>>, vector<1x16xf32>
    %151 = vector.broadcast %150 : vector<1x16xf32> to vector<2x16xf32>
    %152 = arith.addf %149, %151 : vector<2x16xf32>
    %cst_78 = arith.constant 0.000000e+00 : f32
    %153 = vector.broadcast %cst_78 : f32 to vector<2x16xf32>
    %154 = arith.maximumf %152, %153 : vector<2x16xf32>
    %155 = arith.truncf %154 : vector<2x16xf32> to vector<2x16xbf16>
    %c0_79 = arith.constant 0 : index
    %c0_80 = arith.constant 0 : index
    %156 = vector.load %arg19[%c0_79, %c0_80] : memref<16x128xf32, #tpu.memory_space<vmem>>, vector<16x128xf32>
    %157 = arith.truncf %156 : vector<16x128xf32> to vector<16x128xbf16>
    %cst_81 = arith.constant dense<0.000000e+00> : vector<2x128xf32>
    %158 = tpu.matmul %155, %157, %cst_81 {dimension_numbers = #tpu.dot_dimension_numbers<[1], [0], [0], [1], [0, 0, 1, 1], [], []>} : vector<2x16xbf16>, vector<16x128xbf16>, vector<2x128xf32> -> vector<2x128xf32>
    %c0_82 = arith.constant 0 : index
    %c0_83 = arith.constant 0 : index
    %159 = vector.load %arg20[%c0_82, %c0_83] : memref<1x128xf32, #tpu.memory_space<vmem>>, vector<1x128xf32>
    %160 = vector.broadcast %159 : vector<1x128xf32> to vector<2x128xf32>
    %161 = arith.addf %158, %160 : vector<2x128xf32>
    %c0_84 = arith.constant 0 : index
    %c0_85 = arith.constant 0 : index
    %162 = vector.load %arg21[%c0_84, %c0_85] : memref<2x128xf32, #tpu.memory_space<vmem>>, vector<2x128xf32>
    tpu.vector_store %arg21[%c0_84, %c0_85], %161 {strides = array<i32>} : memref<2x128xf32, #tpu.memory_space<vmem>>, vector<2x128xf32>,
    return
  }
}

</mosaic_0001>

<llo_original>
// kernel: gcn_forward.2
$region0: #{gcn_forward.2}
  #allocation0 [shape = 'u32[]', space=smem, size = 0x4, offset = 0x4, fixed_abs, tag = 'smem constant byte address 0x4 - core index']
  #allocation1 [shape = 'u32[144,128]{1,0:T(1,128)}', space=vmem, size = 0x12000, scoped, tag = 'internal scratch']
  %s0 = inlined_call_operand.hbm [shape: f32[16,12], index: 0, kind: input, shape index: {}]
  %s1 = inlined_call_operand.hbm [shape: f32[12,128], index: 1, kind: input, shape index: {}]
  %s2 = inlined_call_operand.vmem [shape: f32[1,128], index: 2, kind: input, shape index: {}]
  %s3 = inlined_call_operand.vmem [shape: f32[16,16], index: 3, kind: output, shape index: {}]
  %s4 = sld [smem:[#allocation0]]
  $region30: #{gcn_forward.2} parent=0
    _
  %s6 = ssub.s32 1, %s4
  %s7 = scalar_select 0, %s6, %s4
  $region1: #{gcn_forward.2} parent=0
    #allocation2 [shape = 'u8[8192]{0}', space=vmem, size = 0x2000, scoped, tag = 'input window, operand 0, single buffered']
    #allocation3 [shape = 's32[1]{0}', space=sflag, size = 0x4, scoped, tag = 'scoped memory for gcn_forward.2']
    #allocation4 [shape = 'u8[8192]{0}', space=vmem, size = 0x2000, scoped, tag = 'input window, operand 1, single buffered']
    #allocation5 [shape = 's32[1]{0}', space=sflag, size = 0x4, scoped, tag = 'scoped memory for gcn_forward.2']
    %8 = vsyncpa [#allocation3], 0
    %9 = vsyncpa [#allocation5], 0
    // Predicated region
    $region2: #{gcn_forward.2} parent=1 // pred_check
      _
    $region3: #{gcn_forward.2} parent=1 // pred_check_branch
      %11 = sbr.rel (0) target = $region5
    $region4: #{gcn_forward.2} parent=1 // pred_region
      %s13 = ssub.s32 256, 256
      %14 = vsyncadd [#allocation3], %s13
      %s15 = sshll.u32 [#allocation2], 4
      %s16 = int_to_ptr.vmem [resolvable:$true] %s15
      %21 = dma.hbm_to_vmem [thread:$0]  %s0, 256, %s16, [#allocation3], 128, 128, 8
    $region5: #{gcn_forward.2} parent=1 // pred_fallthru
      _
    // Predicated region
    $region6: #{gcn_forward.2} parent=1 // pred_check
      _
    $region7: #{gcn_forward.2} parent=1 // pred_check_branch
      %23 = sbr.rel (0) target = $region9
    $region8: #{gcn_forward.2} parent=1 // pred_region
      %s25 = ssub.s32 256, 256
      %26 = vsyncadd [#allocation5], %s25
      %s27 = sshll.u32 [#allocation4], 4
      %s28 = int_to_ptr.vmem [resolvable:$true] %s27
      %33 = dma.hbm_to_vmem [thread:$0]  %s1, 256, %s28, [#allocation5], 128, 128, 8
    $region9: #{gcn_forward.2} parent=1 // pred_fallthru
      _
    // Predicated region
    $region10: #{gcn_forward.2} parent=1 // pred_check
      _
    $region11: #{gcn_forward.2} parent=1 // pred_check_branch
      %35 = sbr.rel (0) target = $region13
    $region12: #{gcn_forward.2} parent=1 // pred_region
      _
    $region13: #{gcn_forward.2} parent=1 // pred_fallthru
      _
    // Predicated region
    $region14: #{gcn_forward.2} parent=1 // pred_check
      _
    $region15: #{gcn_forward.2} parent=1 // pred_check_branch
      %37 = sbr.rel (0) target = $region17
    $region16: #{gcn_forward.2} parent=1 // pred_region
      %38 = dma.done [#allocation3], 256
    $region17: #{gcn_forward.2} parent=1 // pred_fallthru
      _
    // Predicated region
    $region18: #{gcn_forward.2} parent=1 // pred_check
      _
    $region19: #{gcn_forward.2} parent=1 // pred_check_branch
      %40 = sbr.rel (0) target = $region21
    $region20: #{gcn_forward.2} parent=1 // pred_region
      %41 = dma.done [#allocation5], 256
    $region21: #{gcn_forward.2} parent=1 // pred_fallthru
      _
    %v42 = vld [vmem:[#allocation2] sm:$0xff]
    %v43 = vld [vmem:[#allocation2 + $0x8] sm:$0xff]
    %v44 = vld [vmem:[#allocation4] sm:$0xff]
    %v45 = vld [vmem:[#allocation4 + $0x8] sm:$0xf]
    %v46 = vld [vmem:[%s2] sm:$0x1]
    %v48 = vlaneseq
    %v49 = vshrl.u32 %v48, 7
    %v50 = vsub.s32 0, %v49
    %v51 = vrot.slane %v46, %v50
    %vm53 = vcmask 97280
    %v55 = vsel %vm53, %v42, 0
    %v58 = vsel %vm53, %v43, 0
    %vm60 = vcmask 1043456
    %v62 = vsel %vm60, %v45, 0
    %64 = vmatprep.subr.mxu0 0.0
    %65 = vmatpush1.msra.mxu0 %v44
    %66 = vmatprep.subr.mxu0 0.0
    %67 = vmatpush1.msra.mxu0 %v62
    %68 = vmatprep.subr.mxu0 0.0
    %69 = vmatpush1.msra.mxu0 0.0
    %70 = vmatprep.subr.mxu0 0.0
    %71 = vmatpush1.msra.mxu0 0.0
    %72 = vmatprep.subr.mxu0 0.0
    %73 = vmatpush1.msra.mxu0 0.0
    %74 = vmatprep.subr.mxu0 0.0
    %75 = vmatpush1.msra.mxu0 0.0
    %76 = vmatprep.subr.mxu0 0.0
    %77 = vmatpush1.msra.mxu0 0.0
    %78 = vmatprep.subr.mxu0 0.0
    %79 = vmatpush1.msra.mxu0 0.0
    %80 = vmatprep.subr.mxu0 0.0
    %81 = vmatpush1.msra.mxu0 0.0
    %82 = vmatprep.subr.mxu0 0.0
    %83 = vmatpush1.msra.mxu0 0.0
    %84 = vmatprep.subr.mxu0 0.0
    %85 = vmatpush1.msra.mxu0 0.0
    %86 = vmatprep.subr.mxu0 0.0
    %87 = vmatpush1.msra.mxu0 0.0
    %88 = vmatprep.subr.mxu0 0.0
    %89 = vmatpush1.msra.mxu0 0.0
    %90 = vmatprep.subr.mxu0 0.0
    %91 = vmatpush1.msra.mxu0 0.0
    %92 = vmatprep.subr.mxu0 0.0
    %93 = vmatpush1.msra.mxu0 0.0
    %94 = vmatprep.subr.mxu0 0.0
    %95 = vmatpush1.msra.mxu0 0.0
    %96 = vmatprep.subr.mxu0 0.0
    %97 = vmatpush1.msra.mxu0 0.0
    %98 = vmatprep.subr.mxu0 0.0
    %99 = vmatpush1.msra.mxu0 0.0
    %100 = vmatprep.subr.mxu0 0.0
    %101 = vmatpush1.msra.mxu0 0.0
    %102 = vmatprep.subr.mxu0 0.0
    %103 = vmatpush1.msra.mxu0 0.0
    %104 = vmatprep.subr.mxu0 0.0
    %105 = vmatpush1.msra.mxu0 0.0
    %106 = vmatprep.subr.mxu0 0.0
    %107 = vmatpush1.msra.mxu0 0.0
    %108 = vmatprep.subr.mxu0 0.0
    %109 = vmatpush1.msra.mxu0 0.0
    %110 = vmatprep.subr.mxu0 0.0
    %111 = vmatpush1.msra.mxu0 0.0
    %112 = vmatprep.subr.mxu0 0.0
    %113 = vmatpush1.msra.mxu0 0.0
    %114 = vmatprep.subr.mxu0 0.0
    %115 = vmatpush1.msra.mxu0 0.0
    %116 = vmatprep.subr.mxu0 0.0
    %117 = vmatpush1.msra.mxu0 0.0
    %118 = vmatprep.subr.mxu0 0.0
    %119 = vmatpush1.msra.mxu0 0.0
    %120 = vmatprep.subr.mxu0 0.0
    %121 = vmatpush1.msra.mxu0 0.0
    %122 = vmatprep.subr.mxu0 0.0
    %123 = vmatpush1.msra.mxu0 0.0
    %124 = vmatprep.subr.mxu0 0.0
    %125 = vmatpush1.msra.mxu0 0.0
    %126 = vmatprep.subr.mxu0 0.0
    %127 = vmatpush1.msra.mxu0 0.0
    %128 = vmatprep.mubr.f32.mxu0 0.0
    %129 = vmatmul.mubr.f32.gmra.mrb[0].mxu0 %v55
    %v130 = vpop.f32.mrb[0].mxu0
    %v131 = vadd.f32 %v51, %v130
    %v132 = vpop.f32.mrb[0].mxu0
    %133 = vmatprep.mubr.f32.mxu0 0.0
    %134 = vmatmul.mubr.f32.gmra.mrb[0].mxu0 %v58
    %v135 = vpop.f32.mrb[0].mxu0
    %v136 = vadd.f32 %v51, %v135
    %v137 = vpop.f32.mrb[0].mxu0
    %138 = vdwg.mxu0
    %v139 = vmul.f32 %v131, 0.1
    %v140 = vmul.f32 %v136, 0.1
    %v141 = vtanh.pop %v139
    %v142 = vtanh.pop %v140
    %145 = vrot.lane.b32.xlu0 %v141, 64
    %v146 = vpop.permute.xlu0 %145
    %147 = vrot.lane.b32.xlu0 %v142, 64
    %v148 = vpop.permute.xlu0 %147
    %vm149 = vcmask 523264
    %v150 = vsel %vm149, %v141, 0
    %v152 = vsel %vm149, %v142, 0
    %v154 = vsel %vm149, %v146, 0
    %v156 = vsel %vm149, %v148, 0
    %158 = vmatprep.subr.mxu0 0.0
    %159 = vmatpush1.xpose.msra.mxu0 %v154
    %160 = vmatprep.subr.mxu0 0.0
    %161 = vmatpush1.xpose.msra.mxu0 %v156
    %162 = vmatprep.subr.mxu0 0.0
    %163 = vmatpush1.xpose.msra.mxu0 0.0
    %164 = vmatprep.subr.mxu0 0.0
    %165 = vmatpush1.xpose.msra.mxu0 0.0
    %166 = vmatprep.subr.mxu0 0.0
    %167 = vmatpush1.xpose.msra.mxu0 0.0
    %168 = vmatprep.subr.mxu0 0.0
    %169 = vmatpush1.xpose.msra.mxu0 0.0
    %170 = vmatprep.subr.mxu0 0.0
    %171 = vmatpush1.xpose.msra.mxu0 0.0
    %172 = vmatprep.subr.mxu0 0.0
    %173 = vmatpush1.xpose.msra.mxu0 0.0
    %174 = vmatprep.subr.mxu0 0.0
    %175 = vmatpush1.xpose.msra.mxu0 0.0
    %176 = vmatprep.subr.mxu0 0.0
    %177 = vmatpush1.xpose.msra.mxu0 0.0
    %178 = vmatprep.subr.mxu0 0.0
    %179 = vmatpush1.xpose.msra.mxu0 0.0
    %180 = vmatprep.subr.mxu0 0.0
    %181 = vmatpush1.xpose.msra.mxu0 0.0
    %182 = vmatprep.subr.mxu0 0.0
    %183 = vmatpush1.xpose.msra.mxu0 0.0
    %184 = vmatprep.subr.mxu0 0.0
    %185 = vmatpush1.xpose.msra.mxu0 0.0
    %186 = vmatprep.subr.mxu0 0.0
    %187 = vmatpush1.xpose.msra.mxu0 0.0
    %188 = vmatprep.subr.mxu0 0.0
    %189 = vmatpush1.xpose.msra.mxu0 0.0
    %190 = vmatprep.subr.mxu0 0.0
    %191 = vmatpush1.xpose.msra.mxu0 0.0
    %192 = vmatprep.subr.mxu0 0.0
    %193 = vmatpush1.xpose.msra.mxu0 0.0
    %194 = vmatprep.subr.mxu0 0.0
    %195 = vmatpush1.xpose.msra.mxu0 0.0
    %196 = vmatprep.subr.mxu0 0.0
    %197 = vmatpush1.xpose.msra.mxu0 0.0
    %198 = vmatprep.subr.mxu0 0.0
    %199 = vmatpush1.xpose.msra.mxu0 0.0
    %200 = vmatprep.subr.mxu0 0.0
    %201 = vmatpush1.xpose.msra.mxu0 0.0
    %202 = vmatprep.subr.mxu0 0.0
    %203 = vmatpush1.xpose.msra.mxu0 0.0
    %204 = vmatprep.subr.mxu0 0.0
    %205 = vmatpush1.xpose.msra.mxu0 0.0
    %206 = vmatprep.subr.mxu0 0.0
    %207 = vmatpush1.xpose.msra.mxu0 0.0
    %208 = vmatprep.subr.mxu0 0.0
    %209 = vmatpush1.xpose.msra.mxu0 0.0
    %210 = vmatprep.subr.mxu0 0.0
    %211 = vmatpush1.xpose.msra.mxu0 0.0
    %212 = vmatprep.subr.mxu0 0.0
    %213 = vmatpush1.xpose.msra.mxu0 0.0
    %214 = vmatprep.subr.mxu0 0.0
    %215 = vmatpush1.xpose.msra.mxu0 0.0
    %216 = vmatprep.subr.mxu0 0.0
    %217 = vmatpush1.xpose.msra.mxu0 0.0
    %218 = vmatprep.subr.mxu0 0.0
    %219 = vmatpush1.xpose.msra.mxu0 0.0
    %220 = vmatprep.subr.mxu0 0.0
    %221 = vmatpush1.xpose.msra.mxu0 0.0
    %222 = vmatprep.mubr.f32.mxu0 0.0
    %223 = vmatmul.mubr.f32.gmra.mrb[0].mxu0 %v150
    %v224 = vpop.f32.mrb[0].mxu0
    %v225 = vadd.f32 0.0, %v224
    %v226 = vpop.f32.mrb[0].mxu0
    %227 = vmatprep.mubr.f32.mxu0 0.0
    %228 = vmatmul.mubr.f32.gmra.mrb[0].mxu0 %v152
    %v229 = vpop.f32.mrb[0].mxu0
    %v230 = vadd.f32 0.0, %v229
    %v231 = vpop.f32.mrb[0].mxu0
    %232 = vdwg.mxu0
    %v233 = vmul.f32 %v225, 2.0
    %v234 = vmul.f32 %v230, 2.0
    %v235 = vxor.u32 %v233, 2147483648
    %v236 = vxor.u32 %v234, 2147483648
    %v237 = vmul.f32 %v235, 1.442695
    %v238 = vpow.pop %v237
    %v239 = vmul.f32 %v236, 1.442695
    %v240 = vpow.pop %v239
    %v241 = vadd.f32 %v238, 1.0
    %v242 = vadd.f32 %v240, 1.0
    %v243 = vrcp.pop %v241
    %v244 = vmul.f32 1.0, %v243
    %v245 = vrcp.pop %v242
    %v246 = vmul.f32 1.0, %v245
    %vm247 = vcmask 130048
    %248 = vst.msk [vmem:[%s3] sm:$0xff] %vm247, %v244
    %249 = vst.msk [vmem:[%s3 + $0x8] sm:$0xff] %vm247, %v246
    // Predicated region
    $region22: #{gcn_forward.2} parent=1 // pred_check
      _
    $region23: #{gcn_forward.2} parent=1 // pred_check_branch
      %251 = sbr.rel (0) target = $region25
    $region24: #{gcn_forward.2} parent=1 // pred_region
      _
    $region25: #{gcn_forward.2} parent=1 // pred_fallthru
      _
    // Predicated region
    $region26: #{gcn_forward.2} parent=1 // pred_check
      _
    $region27: #{gcn_forward.2} parent=1 // pred_check_branch
      %253 = sbr.rel (0) target = $region29
    $region28: #{gcn_forward.2} parent=1 // pred_region
      _
    $region29: #{gcn_forward.2} parent=1 // pred_fallthru
      _
    %254 = vsyncpa [#allocation3], 1
    %255 = vsyncpa [#allocation5], 1

// kernel: gcn_forward.3
$region0: #{gcn_forward.3}
  #allocation0 [shape = 'u32[]', space=smem, size = 0x4, offset = 0x4, fixed_abs, tag = 'smem constant byte address 0x4 - core index']
  #allocation1 [shape = 'u32[144,128]{1,0:T(1,128)}', space=vmem, size = 0x12000, scoped, tag = 'internal scratch']
  %s0 = inlined_call_operand.vmem [shape: f32[16,16], index: 0, kind: input, shape index: {}]
  %s1 = inlined_call_operand.vmem [shape: f32[16,16], index: 1, kind: input, shape index: {}]
  %s2 = inlined_call_operand.vmem [shape: f32[32,8], index: 2, kind: input, shape index: {}]
  %s3 = inlined_call_operand.vmem [shape: f32[32,16], index: 3, kind: input, shape index: {}]
  %s4 = inlined_call_operand.vmem [shape: f32[32,32], index: 4, kind: input, shape index: {}]
  %s5 = inlined_call_operand.vmem [shape: f32[2,32], index: 5, kind: input, shape index: {}]
  %s6 = inlined_call_operand.vmem [shape: f32[8,32], index: 6, kind: input, shape index: {}]
  %s7 = inlined_call_operand.vmem [shape: f32[1,32], index: 7, kind: input, shape index: {}]
  %s8 = inlined_call_operand.vmem [shape: f32[1,32], index: 8, kind: input, shape index: {}]
  %s9 = inlined_call_operand.vmem [shape: f32[32,16], index: 9, kind: input, shape index: {}]
  %s10 = inlined_call_operand.vmem [shape: f32[32,32], index: 10, kind: input, shape index: {}]
  %s11 = inlined_call_operand.vmem [shape: f32[1,32], index: 11, kind: input, shape index: {}]
  %s12 = inlined_call_operand.vmem [shape: f32[1,32], index: 12, kind: input, shape index: {}]
  %s13 = inlined_call_operand.vmem [shape: f32[32,16], index: 13, kind: input, shape index: {}]
  %s14 = inlined_call_operand.vmem [shape: f32[32,100], index: 14, kind: input, shape index: {}]
  %s15 = inlined_call_operand.vmem [shape: f32[1,100], index: 15, kind: input, shape index: {}]
  %s16 = inlined_call_operand.vmem [shape: f32[1,100], index: 16, kind: input, shape index: {}]
  %s17 = inlined_call_operand.vmem [shape: f32[100,16], index: 17, kind: input, shape index: {}]
  %s18 = inlined_call_operand.vmem [shape: f32[1,16], index: 18, kind: input, shape index: {}]
  %s19 = inlined_call_operand.vmem [shape: f32[16,128], index: 19, kind: input, shape index: {}]
  %s20 = inlined_call_operand.vmem [shape: f32[1,128], index: 20, kind: input, shape index: {}]
  %s21 = inlined_call_operand.hbm [shape: f32[2,128], index: 21, kind: output, shape index: {}]
  %s22 = sld [smem:[#allocation0]]
  $region94: #{gcn_forward.3} parent=0
    _
  %s24 = ssub.s32 1, %s22
  %s25 = scalar_select 0, %s24, %s22
  $region1: #{gcn_forward.3} parent=0
    #allocation2 [shape = 'u8[1024]{0}', space=vmem, size = 0x400, scoped, tag = 'output window, operand 0, single buffered']
    #allocation3 [shape = 's32[1]{0}', space=sflag, size = 0x4, scoped, tag = 'scoped memory for gcn_forward.3']
    %26 = vsyncpa [#allocation3], 0
    // Predicated region
    $region2: #{gcn_forward.3} parent=1 // pred_check
      _
    $region3: #{gcn_forward.3} parent=1 // pred_check_branch
      %28 = sbr.rel (0) target = $region5
    $region4: #{gcn_forward.3} parent=1 // pred_region
      _
    $region5: #{gcn_forward.3} parent=1 // pred_fallthru
      _
    // Predicated region
    $region6: #{gcn_forward.3} parent=1 // pred_check
      _
    $region7: #{gcn_forward.3} parent=1 // pred_check_branch
      %30 = sbr.rel (0) target = $region9
    $region8: #{gcn_forward.3} parent=1 // pred_region
      _
    $region9: #{gcn_forward.3} parent=1 // pred_fallthru
      _
    // Predicated region
    $region10: #{gcn_forward.3} parent=1 // pred_check
      _
    $region11: #{gcn_forward.3} parent=1 // pred_check_branch
      %32 = sbr.rel (0) target = $region13
    $region12: #{gcn_forward.3} parent=1 // pred_region
      _
    $region13: #{gcn_forward.3} parent=1 // pred_fallthru
      _
    // Predicated region
    $region14: #{gcn_forward.3} parent=1 // pred_check
      _
    $region15: #{gcn_forward.3} parent=1 // pred_check_branch
      %34 = sbr.rel (0) target = $region17
    $region16: #{gcn_forward.3} parent=1 // pred_region
      _
    $region17: #{gcn_forward.3} parent=1 // pred_fallthru
      _
    // Predicated region
    $region18: #{gcn_forward.3} parent=1 // pred_check
      _
    $region19: #{gcn_forward.3} parent=1 // pred_check_branch
      %36 = sbr.rel (0) target = $region21
    $region20: #{gcn_forward.3} parent=1 // pred_region
      _
    $region21: #{gcn_forward.3} parent=1 // pred_fallthru
      _
    // Predicated region
    $region22: #{gcn_forward.3} parent=1 // pred_check
      _
    $region23: #{gcn_forward.3} parent=1 // pred_check_branch
      %38 = sbr.rel (0) target = $region25
    $region24: #{gcn_forward.3} parent=1 // pred_region
      _
    $region25: #{gcn_forward.3} parent=1 // pred_fallthru
      _
    // Predicated region
    $region26: #{gcn_forward.3} parent=1 // pred_check
      _
    $region27: #{gcn_forward.3} parent=1 // pred_check_branch
      %40 = sbr.rel (0) target = $region29
    $region28: #{gcn_forward.3} parent=1 // pred_region
      _
    $region29: #{gcn_forward.3} parent=1 // pred_fallthru
      _
    // Predicated region
    $region30: #{gcn_forward.3} parent=1 // pred_check
      _
    $region31: #{gcn_forward.3} parent=1 // pred_check_branch
      %42 = sbr.rel (0) target = $region33
    $region32: #{gcn_forward.3} parent=1 // pred_region
      _
    $region33: #{gcn_forward.3} parent=1 // pred_fallthru
      _
    // Predicated region
    $region34: #{gcn_forward.3} parent=1 // pred_check
      _
    $region35: #{gcn_forward.3} parent=1 // pred_check_branch
      %44 = sbr.rel (0) target = $region37
    $region36: #{gcn_forward.3} parent=1 // pred_region
      _
    $region37: #{gcn_forward.3} parent=1 // pred_fallthru
      _
    // Predicated region
    $region38: #{gcn_forward.3} parent=1 // pred_check
      _
    $region39: #{gcn_forward.3} parent=1 // pred_check_branch
      %46 = sbr.rel (0) target = $region41
    $region40: #{gcn_forward.3} parent=1 // pred_region
      _
    $region41: #{gcn_forward.3} parent=1 // pred_fallthru
      _
    // Predicated region
    $region42: #{gcn_forward.3} parent=1 // pred_check
      _
    $region43: #{gcn_forward.3} parent=1 // pred_check_branch
      %48 = sbr.rel (0) target = $region45
    $region44: #{gcn_forward.3} parent=1 // pred_region
      _
    $region45: #{gcn_forward.3} parent=1 // pred_fallthru
      _
    // Predicated region
    $region46: #{gcn_forward.3} parent=1 // pred_check
      _
    $region47: #{gcn_forward.3} parent=1 // pred_check_branch
      %50 = sbr.rel (0) target = $region49
    $region48: #{gcn_forward.3} parent=1 // pred_region
      _
    $region49: #{gcn_forward.3} parent=1 // pred_fallthru
      _
    // Predicated region
    $region50: #{gcn_forward.3} parent=1 // pred_check
      _
    $region51: #{gcn_forward.3} parent=1 // pred_check_branch
      %52 = sbr.rel (0) target = $region53
    $region52: #{gcn_forward.3} parent=1 // pred_region
      _
    $region53: #{gcn_forward.3} parent=1 // pred_fallthru
      _
    // Predicated region
    $region54: #{gcn_forward.3} parent=1 // pred_check
      _
    $region55: #{gcn_forward.3} parent=1 // pred_check_branch
      %54 = sbr.rel (0) target = $region57
    $region56: #{gcn_forward.3} parent=1 // pred_region
      _
    $region57: #{gcn_forward.3} parent=1 // pred_fallthru
      _
    // Predicated region
    $region58: #{gcn_forward.3} parent=1 // pred_check
      _
    $region59: #{gcn_forward.3} parent=1 // pred_check_branch
      %56 = sbr.rel (0) target = $region61
    $region60: #{gcn_forward.3} parent=1 // pred_region
      _
    $region61: #{gcn_forward.3} parent=1 // pred_fallthru
      _
    // Predicated region
    $region62: #{gcn_forward.3} parent=1 // pred_check
      _
    $region63: #{gcn_forward.3} parent=1 // pred_check_branch
      %58 = sbr.rel (0) target = $region65
    $region64: #{gcn_forward.3} parent=1 // pred_region
      _
    $region65: #{gcn_forward.3} parent=1 // pred_fallthru
      _
    // Predicated region
    $region66: #{gcn_forward.3} parent=1 // pred_check
      _
    $region67: #{gcn_forward.3} parent=1 // pred_check_branch
      %60 = sbr.rel (0) target = $region69
    $region68: #{gcn_forward.3} parent=1 // pred_region
      _
    $region69: #{gcn_forward.3} parent=1 // pred_fallthru
      _
    // Predicated region
    $region70: #{gcn_forward.3} parent=1 // pred_check
      _
    $region71: #{gcn_forward.3} parent=1 // pred_check_branch
      %62 = sbr.rel (0) target = $region73
    $region72: #{gcn_forward.3} parent=1 // pred_region
      _
    $region73: #{gcn_forward.3} parent=1 // pred_fallthru
      _
    // Predicated region
    $region74: #{gcn_forward.3} parent=1 // pred_check
      _
    $region75: #{gcn_forward.3} parent=1 // pred_check_branch
      %64 = sbr.rel (0) target = $region77
    $region76: #{gcn_forward.3} parent=1 // pred_region
      _
    $region77: #{gcn_forward.3} parent=1 // pred_fallthru
      _
    // Predicated region
    $region78: #{gcn_forward.3} parent=1 // pred_check
      _
    $region79: #{gcn_forward.3} parent=1 // pred_check_branch
      %66 = sbr.rel (0) target = $region81
    $region80: #{gcn_forward.3} parent=1 // pred_region
      _
    $region81: #{gcn_forward.3} parent=1 // pred_fallthru
      _
    // Predicated region
    $region82: #{gcn_forward.3} parent=1 // pred_check
      _
    $region83: #{gcn_forward.3} parent=1 // pred_check_branch
      %68 = sbr.rel (0) target = $region85
    $region84: #{gcn_forward.3} parent=1 // pred_region
      _
    $region85: #{gcn_forward.3} parent=1 // pred_fallthru
      _
    %v70 = vld [vmem:[%s0] sm:$0xff]
    %v71 = vld [vmem:[%s0 + $0x8] sm:$0xff]
    %v72 = vld [vmem:[%s1] sm:$0xff]
    %v73 = vld [vmem:[%s1 + $0x8] sm:$0xff]
    %v74 = vmul.f32 %v70, %v72
    %v75 = vmul.f32 %v71, %v73
    %v76 = vlaneseq
    %v77 = vshrl.u32 %v76, 7
    %v78 = vadd.s32 %v77, 8
    %v79 = vlaneseq
    %v80 = vand.u32 %v79, 127
    %vm81 = vcmp.eq.s32.totalorder %v77, %v80
    %vm82 = vcmp.eq.s32.totalorder %v78, %v80
    %v83 = vmax.f32 %v74, 0.5
    %v84 = vmax.f32 %v75, 0.5
    %v85 = vsel %vm81, %v83, %v74
    %v86 = vsel %vm82, %v84, %v75
    %v87 = vld [vmem:[%s3] sm:$0xff]
    %v88 = vld [vmem:[%s3 + $0x8] sm:$0xff]
    %v89 = vld [vmem:[%s3 + $0x10] sm:$0xff]
    %v90 = vld [vmem:[%s3 + $0x18] sm:$0xff]
    %vm91 = vcmask 130048
    %v93 = vsel %vm91, %v87, 0
    %v96 = vsel %vm91, %v88, 0
    %v99 = vsel %vm91, %v89, 0
    %v102 = vsel %vm91, %v90, 0
    %104 = vmatprep.subr.mxu0 0.0
    %105 = vmatpush1.msra.mxu0 %v85
    %106 = vmatprep.subr.mxu0 0.0
    %107 = vmatpush1.msra.mxu0 %v86
    %108 = vmatprep.subr.mxu0 0.0
    %109 = vmatpush1.msra.mxu0 0.0
    %110 = vmatprep.subr.mxu0 0.0
    %111 = vmatpush1.msra.mxu0 0.0
    %112 = vmatprep.subr.mxu0 0.0
    %113 = vmatpush1.msra.mxu0 0.0
    %114 = vmatprep.subr.mxu0 0.0
    %115 = vmatpush1.msra.mxu0 0.0
    %116 = vmatprep.subr.mxu0 0.0
    %117 = vmatpush1.msra.mxu0 0.0
    %118 = vmatprep.subr.mxu0 0.0
    %119 = vmatpush1.msra.mxu0 0.0
    %120 = vmatprep.subr.mxu0 0.0
    %121 = vmatpush1.msra.mxu0 0.0
    %122 = vmatprep.subr.mxu0 0.0
    %123 = vmatpush1.msra.mxu0 0.0
    %124 = vmatprep.subr.mxu0 0.0
    %125 = vmatpush1.msra.mxu0 0.0
    %126 = vmatprep.subr.mxu0 0.0
    %127 = vmatpush1.msra.mxu0 0.0
    %128 = vmatprep.subr.mxu0 0.0
    %129 = vmatpush1.msra.mxu0 0.0
    %130 = vmatprep.subr.mxu0 0.0
    %131 = vmatpush1.msra.mxu0 0.0
    %132 = vmatprep.subr.mxu0 0.0
    %133 = vmatpush1.msra.mxu0 0.0
    %134 = vmatprep.subr.mxu0 0.0
    %135 = vmatpush1.msra.mxu0 0.0
    %136 = vmatprep.subr.mxu0 0.0
    %137 = vmatpush1.msra.mxu0 0.0
    %138 = vmatprep.subr.mxu0 0.0
    %139 = vmatpush1.msra.mxu0 0.0
    %140 = vmatprep.subr.mxu0 0.0
    %141 = vmatpush1.msra.mxu0 0.0
    %142 = vmatprep.subr.mxu0 0.0
    %143 = vmatpush1.msra.mxu0 0.0
    %144 = vmatprep.subr.mxu0 0.0
    %145 = vmatpush1.msra.mxu0 0.0
    %146 = vmatprep.subr.mxu0 0.0
    %147 = vmatpush1.msra.mxu0 0.0
    %148 = vmatprep.subr.mxu0 0.0
    %149 = vmatpush1.msra.mxu0 0.0
    %150 = vmatprep.subr.mxu0 0.0
    %151 = vmatpush1.msra.mxu0 0.0
    %152 = vmatprep.subr.mxu0 0.0
    %153 = vmatpush1.msra.mxu0 0.0
    %154 = vmatprep.subr.mxu0 0.0
    %155 = vmatpush1.msra.mxu0 0.0
    %156 = vmatprep.subr.mxu0 0.0
    %157 = vmatpush1.msra.mxu0 0.0
    %158 = vmatprep.subr.mxu0 0.0
    %159 = vmatpush1.msra.mxu0 0.0
    %160 = vmatprep.subr.mxu0 0.0
    %161 = vmatpush1.msra.mxu0 0.0
    %162 = vmatprep.subr.mxu0 0.0
    %163 = vmatpush1.msra.mxu0 0.0
    %164 = vmatprep.subr.mxu0 0.0
    %165 = vmatpush1.msra.mxu0 0.0
    %166 = vmatprep.subr.mxu0 0.0
    %167 = vmatpush1.msra.mxu0 0.0
    %168 = vmatprep.mubr.f32.mxu0 0.0
    %169 = vmatmul.mubr.f32.gmra.mrb[0].mxu0 %v93
    %v170 = vpop.f32.mrb[0].mxu0
    %v171 = vadd.f32 0.0, %v170
    %v172 = vpop.f32.mrb[0].mxu0
    %173 = vmatprep.mubr.f32.mxu0 0.0
    %174 = vmatmul.mubr.f32.gmra.mrb[0].mxu0 %v96
    %v175 = vpop.f32.mrb[0].mxu0
    %v176 = vadd.f32 0.0, %v175
    %v177 = vpop.f32.mrb[0].mxu0
    %178 = vmatprep.mubr.f32.mxu0 0.0
    %179 = vmatmul.mubr.f32.gmra.mrb[0].mxu0 %v99
    %v180 = vpop.f32.mrb[0].mxu0
    %v181 = vadd.f32 0.0, %v180
    %v182 = vpop.f32.mrb[0].mxu0
    %183 = vmatprep.mubr.f32.mxu0 0.0
    %184 = vmatmul.mubr.f32.gmra.mrb[0].mxu0 %v102
    %v185 = vpop.f32.mrb[0].mxu0
    %v186 = vadd.f32 0.0, %v185
    %v187 = vpop.f32.mrb[0].mxu0
    %188 = vdwg.mxu0
    %v190 = vsel %vm91, %v171, 0
    %v193 = vsel %vm91, %v176, 0
    %v196 = vsel %vm91, %v181, 0
    %v199 = vsel %vm91, %v186, 0
    %201 = vmatprep.subr.mxu0 0.0
    %202 = vmatpush1.xpose.msra.mxu0 %v93
    %203 = vmatprep.subr.mxu0 0.0
    %204 = vmatpush1.xpose.msra.mxu0 %v96
    %205 = vmatprep.subr.mxu0 0.0
    %206 = vmatpush1.xpose.msra.mxu0 %v99
    %207 = vmatprep.subr.mxu0 0.0
    %208 = vmatpush1.xpose.msra.mxu0 %v102
    %209 = vmatprep.subr.mxu0 0.0
    %210 = vmatpush1.xpose.msra.mxu0 0.0
    %211 = vmatprep.subr.mxu0 0.0
    %212 = vmatpush1.xpose.msra.mxu0 0.0
    %213 = vmatprep.subr.mxu0 0.0
    %214 = vmatpush1.xpose.msra.mxu0 0.0
    %215 = vmatprep.subr.mxu0 0.0
    %216 = vmatpush1.xpose.msra.mxu0 0.0
    %217 = vmatprep.subr.mxu0 0.0
    %218 = vmatpush1.xpose.msra.mxu0 0.0
    %219 = vmatprep.subr.mxu0 0.0
    %220 = vmatpush1.xpose.msra.mxu0 0.0
    %221 = vmatprep.subr.mxu0 0.0
    %222 = vmatpush1.xpose.msra.mxu0 0.0
    %223 = vmatprep.subr.mxu0 0.0
    %224 = vmatpush1.xpose.msra.mxu0 0.0
    %225 = vmatprep.subr.mxu0 0.0
    %226 = vmatpush1.xpose.msra.mxu0 0.0
    %227 = vmatprep.subr.mxu0 0.0
    %228 = vmatpush1.xpose.msra.mxu0 0.0
    %229 = vmatprep.subr.mxu0 0.0
    %230 = vmatpush1.xpose.msra.mxu0 0.0
    %231 = vmatprep.subr.mxu0 0.0
    %232 = vmatpush1.xpose.msra.mxu0 0.0
    %233 = vmatprep.subr.mxu0 0.0
    %234 = vmatpush1.xpose.msra.mxu0 0.0
    %235 = vmatprep.subr.mxu0 0.0
    %236 = vmatpush1.xpose.msra.mxu0 0.0
    %237 = vmatprep.subr.mxu0 0.0
    %238 = vmatpush1.xpose.msra.mxu0 0.0
    %239 = vmatprep.subr.mxu0 0.0
    %240 = vmatpush1.xpose.msra.mxu0 0.0
    %241 = vmatprep.subr.mxu0 0.0
    %242 = vmatpush1.xpose.msra.mxu0 0.0
    %243 = vmatprep.subr.mxu0 0.0
    %244 = vmatpush1.xpose.msra.mxu0 0.0
    %245 = vmatprep.subr.mxu0 0.0
    %246 = vmatpush1.xpose.msra.mxu0 0.0
    %247 = vmatprep.subr.mxu0 0.0
    %248 = vmatpush1.xpose.msra.mxu0 0.0
    %249 = vmatprep.subr.mxu0 0.0
    %250 = vmatpush1.xpose.msra.mxu0 0.0
    %251 = vmatprep.subr.mxu0 0.0
    %252 = vmatpush1.xpose.msra.mxu0 0.0
    %253 = vmatprep.subr.mxu0 0.0
    %254 = vmatpush1.xpose.msra.mxu0 0.0
    %255 = vmatprep.subr.mxu0 0.0
    %256 = vmatpush1.xpose.msra.mxu0 0.0
    %257 = vmatprep.subr.mxu0 0.0
    %258 = vmatpush1.xpose.msra.mxu0 0.0
    %259 = vmatprep.subr.mxu0 0.0
    %260 = vmatpush1.xpose.msra.mxu0 0.0
    %261 = vmatprep.subr.mxu0 0.0
    %262 = vmatpush1.xpose.msra.mxu0 0.0
    %263 = vmatprep.subr.mxu0 0.0
    %264 = vmatpush1.xpose.msra.mxu0 0.0
    %265 = vmatprep.mubr.f32.mxu0 0.0
    %266 = vmatmul.mubr.f32.gmra.mrb[0].mxu0 %v190
    %v267 = vpop.f32.mrb[0].mxu0
    %v268 = vadd.f32 0.0, %v267
    %v269 = vpop.f32.mrb[0].mxu0
    %270 = vmatprep.mubr.f32.mxu0 0.0
    %271 = vmatmul.mubr.f32.gmra.mrb[0].mxu0 %v193
    %v272 = vpop.f32.mrb[0].mxu0
    %v273 = vadd.f32 0.0, %v272
    %v274 = vpop.f32.mrb[0].mxu0
    %275 = vmatprep.mubr.f32.mxu0 0.0
    %276 = vmatmul.mubr.f32.gmra.mrb[0].mxu0 %v196
    %v277 = vpop.f32.mrb[0].mxu0
    %v278 = vadd.f32 0.0, %v277
    %v279 = vpop.f32.mrb[0].mxu0
    %280 = vmatprep.mubr.f32.mxu0 0.0
    %281 = vmatmul.mubr.f32.gmra.mrb[0].mxu0 %v199
    %v282 = vpop.f32.mrb[0].mxu0
    %v283 = vadd.f32 0.0, %v282
    %v284 = vpop.f32.mrb[0].mxu0
    %285 = vdwg.mxu0
    %v286 = vld [vmem:[%s4] sm:$0xff]
    %v287 = vld [vmem:[%s4 + $0x8] sm:$0xff]
    %v288 = vld [vmem:[%s4 + $0x10] sm:$0xff]
    %v289 = vld [vmem:[%s4 + $0x18] sm:$0xff]
    %v290 = vmul.f32 %v286, %v268
    %v291 = vmul.f32 %v287, %v273
    %v292 = vmul.f32 %v288, %v278
    %v293 = vmul.f32 %v289, %v283
    %v294 = vpack.c.bf16 %v291, %v290
    %v295 = vpack.c.bf16 %v293, %v292
    %v296 = vld [vmem:[%s5] sm:$0x3]
    %v297 = vpack.c.bf16 %v296, %v296
    %v298 = vld [vmem:[%s2] sm:$0xff]
    %v299 = vld [vmem:[%s2 + $0x8] sm:$0xff]
    %v300 = vld [vmem:[%s2 + $0x10] sm:$0xff]
    %v301 = vld [vmem:[%s2 + $0x18] sm:$0xff]
    %v302 = vpack.c.bf16 %v299, %v298
    %v303 = vpack.c.bf16 %v301, %v300
    %v304 = vld [vmem:[%s6] sm:$0xff]
    %v305 = vpack.c.bf16 %v304, %v304
    %vm306 = vcmask 64512
    %v308 = vsel %vm306, %v302, 0
    %v311 = vsel %vm306, %v303, 0
    %vm313 = vcmask 1043456
    %v315 = vsel %vm313, %v305, 0
    %317 = vmatprep.subr.bf16.mxu0 0
    %318 = vmatpush1.bf16.msra.mxu0 %v315
    %319 = vmatprep.subr.bf16.mxu0 0
    %320 = vmatpush1.bf16.msra.mxu0 0
    %321 = vmatprep.subr.bf16.mxu0 0
    %322 = vmatpush1.bf16.msra.mxu0 0
    %323 = vmatprep.subr.bf16.mxu0 0
    %324 = vmatpush1.bf16.msra.mxu0 0
    %325 = vmatprep.subr.bf16.mxu0 0
    %326 = vmatpush1.bf16.msra.mxu0 0
    %327 = vmatprep.subr.bf16.mxu0 0
    %328 = vmatpush1.bf16.msra.mxu0 0
    %329 = vmatprep.subr.bf16.mxu0 0
    %330 = vmatpush1.bf16.msra.mxu0 0
    %331 = vmatprep.subr.bf16.mxu0 0
    %332 = vmatpush1.bf16.msra.mxu0 0
    %333 = vmatprep.subr.bf16.mxu0 0
    %334 = vmatpush1.bf16.msra.mxu0 0
    %335 = vmatprep.subr.bf16.mxu0 0
    %336 = vmatpush1.bf16.msra.mxu0 0
    %337 = vmatprep.subr.bf16.mxu0 0
    %338 = vmatpush1.bf16.msra.mxu0 0
    %339 = vmatprep.subr.bf16.mxu0 0
    %340 = vmatpush1.bf16.msra.mxu0 0
    %341 = vmatprep.subr.bf16.mxu0 0
    %342 = vmatpush1.bf16.msra.mxu0 0
    %343 = vmatprep.subr.bf16.mxu0 0
    %344 = vmatpush1.bf16.msra.mxu0 0
    %345 = vmatprep.subr.bf16.mxu0 0
    %346 = vmatpush1.bf16.msra.mxu0 0
    %347 = vmatprep.subr.bf16.mxu0 0
    %348 = vmatpush1.bf16.msra.mxu0 0
    %349 = vmatprep.mubr.bf16.mxu0 0
    %350 = vmatmul.mubr.bf16.gmra.mrb[0].mxu0 %v308
    %v351 = vpop.f32.mrb[0].mxu0
    %v352 = vadd.f32 0.0, %v351
    %v353 = vpop.f32.mrb[0].mxu0
    %v354 = vpop.f32.mrb[0].mxu0
    %v355 = vadd.f32 0.0, %v354
    %v356 = vpop.f32.mrb[0].mxu0
    %357 = vmatprep.mubr.bf16.mxu0 0
    %358 = vmatmul.mubr.bf16.gmra.mrb[0].mxu0 %v311
    %v359 = vpop.f32.mrb[0].mxu0
    %v360 = vadd.f32 0.0, %v359
    %v361 = vpop.f32.mrb[0].mxu0
    %v362 = vpop.f32.mrb[0].mxu0
    %v363 = vadd.f32 0.0, %v362
    %v364 = vpop.f32.mrb[0].mxu0
    %365 = vdwg.mxu0
    %v366 = vpack.c.bf16 %v355, %v352
    %v367 = vpack.c.bf16 %v363, %v360
    %vm368 = vcmask 261120
    %v370 = vsel %vm368, %v294, 0
    %v373 = vsel %vm368, %v295, 0
    %375 = vmatprep.subr.bf16.mxu0 0
    %376 = vmatpush1.bf16.msra.mxu0 %v366
    %377 = vmatprep.subr.bf16.mxu0 0
    %378 = vmatpush1.bf16.msra.mxu0 %v367
    %379 = vmatprep.subr.bf16.mxu0 0
    %380 = vmatpush1.bf16.msra.mxu0 0
    %381 = vmatprep.subr.bf16.mxu0 0
    %382 = vmatpush1.bf16.msra.mxu0 0
    %383 = vmatprep.subr.bf16.mxu0 0
    %384 = vmatpush1.bf16.msra.mxu0 0
    %385 = vmatprep.subr.bf16.mxu0 0
    %386 = vmatpush1.bf16.msra.mxu0 0
    %387 = vmatprep.subr.bf16.mxu0 0
    %388 = vmatpush1.bf16.msra.mxu0 0
    %389 = vmatprep.subr.bf16.mxu0 0
    %390 = vmatpush1.bf16.msra.mxu0 0
    %391 = vmatprep.subr.bf16.mxu0 0
    %392 = vmatpush1.bf16.msra.mxu0 0
    %393 = vmatprep.subr.bf16.mxu0 0
    %394 = vmatpush1.bf16.msra.mxu0 0
    %395 = vmatprep.subr.bf16.mxu0 0
    %396 = vmatpush1.bf16.msra.mxu0 0
    %397 = vmatprep.subr.bf16.mxu0 0
    %398 = vmatpush1.bf16.msra.mxu0 0
    %399 = vmatprep.subr.bf16.mxu0 0
    %400 = vmatpush1.bf16.msra.mxu0 0
    %401 = vmatprep.subr.bf16.mxu0 0
    %402 = vmatpush1.bf16.msra.mxu0 0
    %403 = vmatprep.subr.bf16.mxu0 0
    %404 = vmatpush1.bf16.msra.mxu0 0
    %405 = vmatprep.subr.bf16.mxu0 0
    %406 = vmatpush1.bf16.msra.mxu0 0
    %407 = vmatprep.mubr.bf16.mxu0 0
    %408 = vmatmul.mubr.bf16.gmra.mrb[0].mxu0 %v370
    %v409 = vpop.f32.mrb[0].mxu0
    %v410 = vadd.f32 0.0, %v409
    %v411 = vpop.f32.mrb[0].mxu0
    %v412 = vpop.f32.mrb[0].mxu0
    %v413 = vadd.f32 0.0, %v412
    %v414 = vpop.f32.mrb[0].mxu0
    %415 = vmatprep.mubr.bf16.mxu0 0
    %416 = vmatmul.mubr.bf16.gmra.mrb[0].mxu0 %v373
    %v417 = vpop.f32.mrb[0].mxu0
    %v418 = vadd.f32 0.0, %v417
    %v419 = vpop.f32.mrb[0].mxu0
    %v420 = vpop.f32.mrb[0].mxu0
    %v421 = vadd.f32 0.0, %v420
    %v422 = vpop.f32.mrb[0].mxu0
    %423 = vdwg.mxu0
    %v424 = vsel %vm368, %v410, 0.0
    %v425 = vsel %vm368, %v413, 0.0
    %v426 = vadd.f32 %v424, %v425
    %v427 = vsel %vm368, %v418, 0.0
    %v428 = vadd.f32 %v426, %v427
    %v429 = vsel %vm368, %v421, 0.0
    %v430 = vadd.f32 %v428, %v429
    %v431 = vrot.slane %v430, 4
    %v432 = vadd.f32 %v430, %v431
    %v433 = vrot.slane %v432, 2
    %v434 = vadd.f32 %v432, %v433
    %v435 = vrot.slane %v434, 1
    %v436 = vadd.f32 %v434, %v435
    %v437 = vmul.f32 %v436, 0.03125
    %v438 = vsub.f32 %v410, %v437
    %v439 = vsub.f32 %v413, %v437
    %v440 = vsub.f32 %v418, %v437
    %v441 = vsub.f32 %v421, %v437
    %v442 = vmul.f32 %v438, %v438
    %v443 = vmul.f32 %v439, %v439
    %v444 = vmul.f32 %v440, %v440
    %v445 = vmul.f32 %v441, %v441
    %v446 = vsel %vm368, %v442, 0.0
    %v447 = vsel %vm368, %v443, 0.0
    %v448 = vadd.f32 %v446, %v447
    %v449 = vsel %vm368, %v444, 0.0
    %v450 = vadd.f32 %v448, %v449
    %v451 = vsel %vm368, %v445, 0.0
    %v452 = vadd.f32 %v450, %v451
    %v453 = vrot.slane %v452, 4
    %v454 = vadd.f32 %v452, %v453
    %v455 = vrot.slane %v454, 2
    %v456 = vadd.f32 %v454, %v455
    %v457 = vrot.slane %v456, 1
    %v458 = vadd.f32 %v456, %v457
    %v459 = vmul.f32 %v458, 0.03125
    %v460 = vadd.f32 %v459, 1e-05
    %v461 = vrsqrt.pop %v460
    %v462 = vmul.f32 %v438, %v461
    %v463 = vmul.f32 %v439, %v461
    %v464 = vmul.f32 %v440, %v461
    %v465 = vmul.f32 %v441, %v461
    %v466 = vld [vmem:[%s7] sm:$0x1]
    %v468 = vlaneseq
    %v469 = vshrl.u32 %v468, 7
    %v470 = vsub.s32 0, %v469
    %v471 = vrot.slane %v466, %v470
    %v473 = vmul.f32 %v462, %v471
    %v474 = vmul.f32 %v463, %v471
    %v475 = vmul.f32 %v464, %v471
    %v476 = vmul.f32 %v465, %v471
    %v477 = vld [vmem:[%s8] sm:$0x1]
    %v479 = vlaneseq
    %v480 = vshrl.u32 %v479, 7
    %v481 = vsub.s32 0, %v480
    %v482 = vrot.slane %v477, %v481
    %v484 = vadd.f32 %v473, %v482
    %v485 = vadd.f32 %v474, %v482
    %v486 = vadd.f32 %v475, %v482
    %v487 = vadd.f32 %v476, %v482
    %vm488 = vcmp.gt.f32.partialorder %v484, 0.0
    %vm489 = vcmp.gt.f32.partialorder %v485, 0.0
    %vm490 = vcmp.gt.f32.partialorder %v486, 0.0
    %vm491 = vcmp.gt.f32.partialorder %v487, 0.0
    %v492 = vmin.f32 %v484, 0.0
    %v493 = vmin.f32 %v485, 0.0
    %v494 = vmin.f32 %v486, 0.0
    %v495 = vmin.f32 %v487, 0.0
    %v496 = vmul.f32 %v492, 1.442695
    %v497 = vpow.pop %v496
    %v498 = vmul.f32 %v493, 1.442695
    %v499 = vpow.pop %v498
    %v500 = vmul.f32 %v494, 1.442695
    %v501 = vpow.pop %v500
    %v502 = vmul.f32 %v495, 1.442695
    %v503 = vpow.pop %v502
    %v504 = vsub.f32 %v497, 1.0
    %v505 = vsub.f32 %v499, 1.0
    %v506 = vsub.f32 %v501, 1.0
    %v507 = vsub.f32 %v503, 1.0
    %v508 = vsel %vm488, %v484, %v504
    %v509 = vsel %vm489, %v485, %v505
    %v510 = vsel %vm490, %v486, %v506
    %v511 = vsel %vm491, %v487, %v507
    %v512 = vpack.c.bf16 %v509, %v508
    %v513 = vpack.c.bf16 %v511, %v510
    %v515 = vsel %vm368, %v297, 0
    %517 = vmatprep.subr.bf16.mxu0 0
    %518 = vmatpush1.bf16.msra.mxu0 %v512
    %519 = vmatprep.subr.bf16.mxu0 0
    %520 = vmatpush1.bf16.msra.mxu0 %v513
    %521 = vmatprep.subr.bf16.mxu0 0
    %522 = vmatpush1.bf16.msra.mxu0 0
    %523 = vmatprep.subr.bf16.mxu0 0
    %524 = vmatpush1.bf16.msra.mxu0 0
    %525 = vmatprep.subr.bf16.mxu0 0
    %526 = vmatpush1.bf16.msra.mxu0 0
    %527 = vmatprep.subr.bf16.mxu0 0
    %528 = vmatpush1.bf16.msra.mxu0 0
    %529 = vmatprep.subr.bf16.mxu0 0
    %530 = vmatpush1.bf16.msra.mxu0 0
    %531 = vmatprep.subr.bf16.mxu0 0
    %532 = vmatpush1.bf16.msra.mxu0 0
    %533 = vmatprep.subr.bf16.mxu0 0
    %534 = vmatpush1.bf16.msra.mxu0 0
    %535 = vmatprep.subr.bf16.mxu0 0
    %536 = vmatpush1.bf16.msra.mxu0 0
    %537 = vmatprep.subr.bf16.mxu0 0
    %538 = vmatpush1.bf16.msra.mxu0 0
    %539 = vmatprep.subr.bf16.mxu0 0
    %540 = vmatpush1.bf16.msra.mxu0 0
    %541 = vmatprep.subr.bf16.mxu0 0
    %542 = vmatpush1.bf16.msra.mxu0 0
    %543 = vmatprep.subr.bf16.mxu0 0
    %544 = vmatpush1.bf16.msra.mxu0 0
    %545 = vmatprep.subr.bf16.mxu0 0
    %546 = vmatpush1.bf16.msra.mxu0 0
    %547 = vmatprep.subr.bf16.mxu0 0
    %548 = vmatpush1.bf16.msra.mxu0 0
    %549 = vmatprep.mubr.bf16.mxu0 0
    %550 = vmatmul.mubr.bf16.gmra.mrb[0].mxu0 %v515
    %v551 = vpop.f32.mrb[0].mxu0
    %v552 = vadd.f32 0.0, %v551
    %v553 = vpop.f32.mrb[0].mxu0
    %v554 = vpop.f32.mrb[0].mxu0
    %v555 = vpop.f32.mrb[0].mxu0
    %556 = vdwg.mxu0
    %v557 = vpack.c.bf16 %v552, %v552
    %v558 = vld [vmem:[%s9] sm:$0xff]
    %v559 = vld [vmem:[%s9 + $0x8] sm:$0xff]
    %v560 = vld [vmem:[%s9 + $0x10] sm:$0xff]
    %v561 = vld [vmem:[%s9 + $0x18] sm:$0xff]
    %v562 = vpack.c.bf16 %v559, %v558
    %v563 = vpack.c.bf16 %v561, %v560
    %v564 = vld [vmem:[%s10] sm:$0xff]
    %v565 = vld [vmem:[%s10 + $0x8] sm:$0xff]
    %v566 = vld [vmem:[%s10 + $0x10] sm:$0xff]
    %v567 = vld [vmem:[%s10 + $0x18] sm:$0xff]
    %v568 = vpack.c.bf16 %v565, %v564
    %v569 = vpack.c.bf16 %v567, %v566
    %v571 = vsel %vm368, %v512, 0
    %v574 = vsel %vm368, %v513, 0
    %576 = vmatprep.subr.bf16.mxu0 0
    %577 = vmatpush1.bf16.msra.mxu0 %v568
    %578 = vmatprep.subr.bf16.mxu0 0
    %579 = vmatpush1.bf16.msra.mxu0 %v569
    %580 = vmatprep.subr.bf16.mxu0 0
    %581 = vmatpush1.bf16.msra.mxu0 0
    %582 = vmatprep.subr.bf16.mxu0 0
    %583 = vmatpush1.bf16.msra.mxu0 0
    %584 = vmatprep.subr.bf16.mxu0 0
    %585 = vmatpush1.bf16.msra.mxu0 0
    %586 = vmatprep.subr.bf16.mxu0 0
    %587 = vmatpush1.bf16.msra.mxu0 0
    %588 = vmatprep.subr.bf16.mxu0 0
    %589 = vmatpush1.bf16.msra.mxu0 0
    %590 = vmatprep.subr.bf16.mxu0 0
    %591 = vmatpush1.bf16.msra.mxu0 0
    %592 = vmatprep.subr.bf16.mxu0 0
    %593 = vmatpush1.bf16.msra.mxu0 0
    %594 = vmatprep.subr.bf16.mxu0 0
    %595 = vmatpush1.bf16.msra.mxu0 0
    %596 = vmatprep.subr.bf16.mxu0 0
    %597 = vmatpush1.bf16.msra.mxu0 0
    %598 = vmatprep.subr.bf16.mxu0 0
    %599 = vmatpush1.bf16.msra.mxu0 0
    %600 = vmatprep.subr.bf16.mxu0 0
    %601 = vmatpush1.bf16.msra.mxu0 0
    %602 = vmatprep.subr.bf16.mxu0 0
    %603 = vmatpush1.bf16.msra.mxu0 0
    %604 = vmatprep.subr.bf16.mxu0 0
    %605 = vmatpush1.bf16.msra.mxu0 0
    %606 = vmatprep.subr.bf16.mxu0 0
    %607 = vmatpush1.bf16.msra.mxu0 0
    %608 = vmatprep.mubr.bf16.mxu0 0
    %609 = vmatmul.mubr.bf16.gmra.mrb[0].mxu0 %v571
    %v610 = vpop.f32.mrb[0].mxu0
    %v611 = vadd.f32 0.0, %v610
    %v612 = vpop.f32.mrb[0].mxu0
    %v613 = vpop.f32.mrb[0].mxu0
    %v614 = vadd.f32 0.0, %v613
    %v615 = vpop.f32.mrb[0].mxu0
    %616 = vmatprep.mubr.bf16.mxu0 0
    %617 = vmatmul.mubr.bf16.gmra.mrb[0].mxu0 %v574
    %v618 = vpop.f32.mrb[0].mxu0
    %v619 = vadd.f32 0.0, %v618
    %v620 = vpop.f32.mrb[0].mxu0
    %v621 = vpop.f32.mrb[0].mxu0
    %v622 = vadd.f32 0.0, %v621
    %v623 = vpop.f32.mrb[0].mxu0
    %624 = vdwg.mxu0
    %v625 = vpack.c.bf16 %v614, %v611
    %v626 = vpack.c.bf16 %v622, %v619
    %627 = vmatprep.subr.bf16.mxu0 0
    %628 = vmatpush1.bf16.msra.mxu0 %v625
    %629 = vmatprep.subr.bf16.mxu0 0
    %630 = vmatpush1.bf16.msra.mxu0 %v626
    %631 = vmatprep.subr.bf16.mxu0 0
    %632 = vmatpush1.bf16.msra.mxu0 0
    %633 = vmatprep.subr.bf16.mxu0 0
    %634 = vmatpush1.bf16.msra.mxu0 0
    %635 = vmatprep.subr.bf16.mxu0 0
    %636 = vmatpush1.bf16.msra.mxu0 0
    %637 = vmatprep.subr.bf16.mxu0 0
    %638 = vmatpush1.bf16.msra.mxu0 0
    %639 = vmatprep.subr.bf16.mxu0 0
    %640 = vmatpush1.bf16.msra.mxu0 0
    %641 = vmatprep.subr.bf16.mxu0 0
    %642 = vmatpush1.bf16.msra.mxu0 0
    %643 = vmatprep.subr.bf16.mxu0 0
    %644 = vmatpush1.bf16.msra.mxu0 0
    %645 = vmatprep.subr.bf16.mxu0 0
    %646 = vmatpush1.bf16.msra.mxu0 0
    %647 = vmatprep.subr.bf16.mxu0 0
    %648 = vmatpush1.bf16.msra.mxu0 0
    %649 = vmatprep.subr.bf16.mxu0 0
    %650 = vmatpush1.bf16.msra.mxu0 0
    %651 = vmatprep.subr.bf16.mxu0 0
    %652 = vmatpush1.bf16.msra.mxu0 0
    %653 = vmatprep.subr.bf16.mxu0 0
    %654 = vmatpush1.bf16.msra.mxu0 0
    %655 = vmatprep.subr.bf16.mxu0 0
    %656 = vmatpush1.bf16.msra.mxu0 0
    %657 = vmatprep.subr.bf16.mxu0 0
    %658 = vmatpush1.bf16.msra.mxu0 0
    %659 = vmatprep.mubr.bf16.mxu0 0
    %660 = vmatmul.mubr.bf16.gmra.mrb[0].mxu0 %v370
    %v661 = vpop.f32.mrb[0].mxu0
    %v662 = vadd.f32 0.0, %v661
    %v663 = vpop.f32.mrb[0].mxu0
    %v664 = vpop.f32.mrb[0].mxu0
    %v665 = vadd.f32 0.0, %v664
    %v666 = vpop.f32.mrb[0].mxu0
    %667 = vmatprep.mubr.bf16.mxu0 0
    %668 = vmatmul.mubr.bf16.gmra.mrb[0].mxu0 %v373
    %v669 = vpop.f32.mrb[0].mxu0
    %v670 = vadd.f32 0.0, %v669
    %v671 = vpop.f32.mrb[0].mxu0
    %v672 = vpop.f32.mrb[0].mxu0
    %v673 = vadd.f32 0.0, %v672
    %v674 = vpop.f32.mrb[0].mxu0
    %675 = vdwg.mxu0
    %v676 = vsel %vm368, %v662, 0.0
    %v677 = vsel %vm368, %v665, 0.0
    %v678 = vadd.f32 %v676, %v677
    %v679 = vsel %vm368, %v670, 0.0
    %v680 = vadd.f32 %v678, %v679
    %v681 = vsel %vm368, %v673, 0.0
    %v682 = vadd.f32 %v680, %v681
    %v683 = vrot.slane %v682, 4
    %v684 = vadd.f32 %v682, %v683
    %v685 = vrot.slane %v684, 2
    %v686 = vadd.f32 %v684, %v685
    %v687 = vrot.slane %v686, 1
    %v688 = vadd.f32 %v686, %v687
    %v689 = vmul.f32 %v688, 0.03125
    %v690 = vsub.f32 %v662, %v689
    %v691 = vsub.f32 %v665, %v689
    %v692 = vsub.f32 %v670, %v689
    %v693 = vsub.f32 %v673, %v689
    %v694 = vmul.f32 %v690, %v690
    %v695 = vmul.f32 %v691, %v691
    %v696 = vmul.f32 %v692, %v692
    %v697 = vmul.f32 %v693, %v693
    %v698 = vsel %vm368, %v694, 0.0
    %v699 = vsel %vm368, %v695, 0.0
    %v700 = vadd.f32 %v698, %v699
    %v701 = vsel %vm368, %v696, 0.0
    %v702 = vadd.f32 %v700, %v701
    %v703 = vsel %vm368, %v697, 0.0
    %v704 = vadd.f32 %v702, %v703
    %v705 = vrot.slane %v704, 4
    %v706 = vadd.f32 %v704, %v705
    %v707 = vrot.slane %v706, 2
    %v708 = vadd.f32 %v706, %v707
    %v709 = vrot.slane %v708, 1
    %v710 = vadd.f32 %v708, %v709
    %v711 = vmul.f32 %v710, 0.03125
    %v712 = vadd.f32 %v711, 1e-05
    %v713 = vrsqrt.pop %v712
    %v714 = vmul.f32 %v690, %v713
    %v715 = vmul.f32 %v691, %v713
    %v716 = vmul.f32 %v692, %v713
    %v717 = vmul.f32 %v693, %v713
    %v718 = vld [vmem:[%s11] sm:$0x1]
    %v720 = vlaneseq
    %v721 = vshrl.u32 %v720, 7
    %v722 = vsub.s32 0, %v721
    %v723 = vrot.slane %v718, %v722
    %v725 = vmul.f32 %v714, %v723
    %v726 = vmul.f32 %v715, %v723
    %v727 = vmul.f32 %v716, %v723
    %v728 = vmul.f32 %v717, %v723
    %v729 = vld [vmem:[%s12] sm:$0x1]
    %v731 = vlaneseq
    %v732 = vshrl.u32 %v731, 7
    %v733 = vsub.s32 0, %v732
    %v734 = vrot.slane %v729, %v733
    %v736 = vadd.f32 %v725, %v734
    %v737 = vadd.f32 %v726, %v734
    %v738 = vadd.f32 %v727, %v734
    %v739 = vadd.f32 %v728, %v734
    %vm740 = vcmp.gt.f32.partialorder %v736, 0.0
    %vm741 = vcmp.gt.f32.partialorder %v737, 0.0
    %vm742 = vcmp.gt.f32.partialorder %v738, 0.0
    %vm743 = vcmp.gt.f32.partialorder %v739, 0.0
    %v744 = vmin.f32 %v736, 0.0
    %v745 = vmin.f32 %v737, 0.0
    %v746 = vmin.f32 %v738, 0.0
    %v747 = vmin.f32 %v739, 0.0
    %v748 = vmul.f32 %v744, 1.442695
    %v749 = vpow.pop %v748
    %v750 = vmul.f32 %v745, 1.442695
    %v751 = vpow.pop %v750
    %v752 = vmul.f32 %v746, 1.442695
    %v753 = vpow.pop %v752
    %v754 = vmul.f32 %v747, 1.442695
    %v755 = vpow.pop %v754
    %v756 = vsub.f32 %v749, 1.0
    %v757 = vsub.f32 %v751, 1.0
    %v758 = vsub.f32 %v753, 1.0
    %v759 = vsub.f32 %v755, 1.0
    %v760 = vsel %vm740, %v736, %v756
    %v761 = vsel %vm741, %v737, %v757
    %v762 = vsel %vm742, %v738, %v758
    %v763 = vsel %vm743, %v739, %v759
    %v764 = vadd.f32 %v508, %v760
    %v765 = vadd.f32 %v509, %v761
    %v766 = vadd.f32 %v510, %v762
    %v767 = vadd.f32 %v511, %v763
    %v768 = vpack.c.bf16 %v765, %v764
    %v769 = vpack.c.bf16 %v767, %v766
    %770 = vmatprep.subr.bf16.mxu0 0
    %771 = vmatpush1.bf16.msra.mxu0 %v768
    %772 = vmatprep.subr.bf16.mxu0 0
    %773 = vmatpush1.bf16.msra.mxu0 %v769
    %774 = vmatprep.subr.bf16.mxu0 0
    %775 = vmatpush1.bf16.msra.mxu0 0
    %776 = vmatprep.subr.bf16.mxu0 0
    %777 = vmatpush1.bf16.msra.mxu0 0
    %778 = vmatprep.subr.bf16.mxu0 0
    %779 = vmatpush1.bf16.msra.mxu0 0
    %780 = vmatprep.subr.bf16.mxu0 0
    %781 = vmatpush1.bf16.msra.mxu0 0
    %782 = vmatprep.subr.bf16.mxu0 0
    %783 = vmatpush1.bf16.msra.mxu0 0
    %784 = vmatprep.subr.bf16.mxu0 0
    %785 = vmatpush1.bf16.msra.mxu0 0
    %786 = vmatprep.subr.bf16.mxu0 0
    %787 = vmatpush1.bf16.msra.mxu0 0
    %788 = vmatprep.subr.bf16.mxu0 0
    %789 = vmatpush1.bf16.msra.mxu0 0
    %790 = vmatprep.subr.bf16.mxu0 0
    %791 = vmatpush1.bf16.msra.mxu0 0
    %792 = vmatprep.subr.bf16.mxu0 0
    %793 = vmatpush1.bf16.msra.mxu0 0
    %794 = vmatprep.subr.bf16.mxu0 0
    %795 = vmatpush1.bf16.msra.mxu0 0
    %796 = vmatprep.subr.bf16.mxu0 0
    %797 = vmatpush1.bf16.msra.mxu0 0
    %798 = vmatprep.subr.bf16.mxu0 0
    %799 = vmatpush1.bf16.msra.mxu0 0
    %800 = vmatprep.subr.bf16.mxu0 0
    %801 = vmatpush1.bf16.msra.mxu0 0
    %802 = vmatprep.mubr.bf16.mxu0 0
    %803 = vmatmul.mubr.bf16.gmra.mrb[0].mxu0 %v515
    %v804 = vpop.f32.mrb[0].mxu0
    %v805 = vadd.f32 0.0, %v804
    %v806 = vpop.f32.mrb[0].mxu0
    %v807 = vpop.f32.mrb[0].mxu0
    %v808 = vpop.f32.mrb[0].mxu0
    %809 = vdwg.mxu0
    %v810 = vpack.c.bf16 %v805, %v805
    %v811 = vld [vmem:[%s13] sm:$0xff]
    %v812 = vld [vmem:[%s13 + $0x8] sm:$0xff]
    %v813 = vld [vmem:[%s13 + $0x10] sm:$0xff]
    %v814 = vld [vmem:[%s13 + $0x18] sm:$0xff]
    %v815 = vpack.c.bf16 %v812, %v811
    %v816 = vpack.c.bf16 %v814, %v813
    %v818 = vsel %vm368, %v810, 0
    %820 = vmatprep.subr.bf16.mxu0 0
    %821 = vmatpush1.bf16.msra.mxu0 %v815
    %822 = vmatprep.subr.bf16.mxu0 0
    %823 = vmatpush1.bf16.msra.mxu0 %v816
    %824 = vmatprep.subr.bf16.mxu0 0
    %825 = vmatpush1.bf16.msra.mxu0 0
    %826 = vmatprep.subr.bf16.mxu0 0
    %827 = vmatpush1.bf16.msra.mxu0 0
    %828 = vmatprep.subr.bf16.mxu0 0
    %829 = vmatpush1.bf16.msra.mxu0 0
    %830 = vmatprep.subr.bf16.mxu0 0
    %831 = vmatpush1.bf16.msra.mxu0 0
    %832 = vmatprep.subr.bf16.mxu0 0
    %833 = vmatpush1.bf16.msra.mxu0 0
    %834 = vmatprep.subr.bf16.mxu0 0
    %835 = vmatpush1.bf16.msra.mxu0 0
    %836 = vmatprep.subr.bf16.mxu0 0
    %837 = vmatpush1.bf16.msra.mxu0 0
    %838 = vmatprep.subr.bf16.mxu0 0
    %839 = vmatpush1.bf16.msra.mxu0 0
    %840 = vmatprep.subr.bf16.mxu0 0
    %841 = vmatpush1.bf16.msra.mxu0 0
    %842 = vmatprep.subr.bf16.mxu0 0
    %843 = vmatpush1.bf16.msra.mxu0 0
    %844 = vmatprep.subr.bf16.mxu0 0
    %845 = vmatpush1.bf16.msra.mxu0 0
    %846 = vmatprep.subr.bf16.mxu0 0
    %847 = vmatpush1.bf16.msra.mxu0 0
    %848 = vmatprep.subr.bf16.mxu0 0
    %849 = vmatpush1.bf16.msra.mxu0 0
    %850 = vmatprep.subr.bf16.mxu0 0
    %851 = vmatpush1.bf16.msra.mxu0 0
    %852 = vmatprep.mubr.bf16.mxu0 0
    %853 = vmatmul.mubr.bf16.gmra.mrb[0].mxu0 %v818
    %v854 = vpop.f32.mrb[0].mxu0
    %v855 = vadd.f32 0.0, %v854
    %v856 = vpop.f32.mrb[0].mxu0
    %v857 = vpop.f32.mrb[0].mxu0
    %v858 = vpop.f32.mrb[0].mxu0
    %859 = vdwg.mxu0
    %v861 = vsel %vm368, %v557, 0
    %863 = vmatprep.subr.bf16.mxu0 0
    %864 = vmatpush1.bf16.msra.mxu0 %v562
    %865 = vmatprep.subr.bf16.mxu0 0
    %866 = vmatpush1.bf16.msra.mxu0 %v563
    %867 = vmatprep.subr.bf16.mxu0 0
    %868 = vmatpush1.bf16.msra.mxu0 0
    %869 = vmatprep.subr.bf16.mxu0 0
    %870 = vmatpush1.bf16.msra.mxu0 0
    %871 = vmatprep.subr.bf16.mxu0 0
    %872 = vmatpush1.bf16.msra.mxu0 0
    %873 = vmatprep.subr.bf16.mxu0 0
    %874 = vmatpush1.bf16.msra.mxu0 0
    %875 = vmatprep.subr.bf16.mxu0 0
    %876 = vmatpush1.bf16.msra.mxu0 0
    %877 = vmatprep.subr.bf16.mxu0 0
    %878 = vmatpush1.bf16.msra.mxu0 0
    %879 = vmatprep.subr.bf16.mxu0 0
    %880 = vmatpush1.bf16.msra.mxu0 0
    %881 = vmatprep.subr.bf16.mxu0 0
    %882 = vmatpush1.bf16.msra.mxu0 0
    %883 = vmatprep.subr.bf16.mxu0 0
    %884 = vmatpush1.bf16.msra.mxu0 0
    %885 = vmatprep.subr.bf16.mxu0 0
    %886 = vmatpush1.bf16.msra.mxu0 0
    %887 = vmatprep.subr.bf16.mxu0 0
    %888 = vmatpush1.bf16.msra.mxu0 0
    %889 = vmatprep.subr.bf16.mxu0 0
    %890 = vmatpush1.bf16.msra.mxu0 0
    %891 = vmatprep.subr.bf16.mxu0 0
    %892 = vmatpush1.bf16.msra.mxu0 0
    %893 = vmatprep.subr.bf16.mxu0 0
    %894 = vmatpush1.bf16.msra.mxu0 0
    %895 = vmatprep.mubr.bf16.mxu0 0
    %896 = vmatmul.mubr.bf16.gmra.mrb[0].mxu0 %v861
    %v897 = vpop.f32.mrb[0].mxu0
    %v898 = vadd.f32 %v855, %v897
    %v899 = vpop.f32.mrb[0].mxu0
    %v900 = vpop.f32.mrb[0].mxu0
    %v901 = vpop.f32.mrb[0].mxu0
    %902 = vdwg.mxu0
    %v903 = vld [vmem:[%s14] sm:$0xff]
    %v904 = vld [vmem:[%s14 + $0x8] sm:$0xff]
    %v905 = vld [vmem:[%s14 + $0x10] sm:$0xff]
    %v906 = vld [vmem:[%s14 + $0x18] sm:$0xff]
    %v907 = vpack.c.bf16 %v904, %v903
    %v908 = vpack.c.bf16 %v906, %v905
    %v910 = vsel %vm368, %v768, 0
    %v913 = vsel %vm368, %v769, 0
    %915 = vmatprep.subr.bf16.mxu0 0
    %916 = vmatpush1.bf16.msra.mxu0 %v907
    %917 = vmatprep.subr.bf16.mxu0 0
    %918 = vmatpush1.bf16.msra.mxu0 %v908
    %919 = vmatprep.subr.bf16.mxu0 0
    %920 = vmatpush1.bf16.msra.mxu0 0
    %921 = vmatprep.subr.bf16.mxu0 0
    %922 = vmatpush1.bf16.msra.mxu0 0
    %923 = vmatprep.subr.bf16.mxu0 0
    %924 = vmatpush1.bf16.msra.mxu0 0
    %925 = vmatprep.subr.bf16.mxu0 0
    %926 = vmatpush1.bf16.msra.mxu0 0
    %927 = vmatprep.subr.bf16.mxu0 0
    %928 = vmatpush1.bf16.msra.mxu0 0
    %929 = vmatprep.subr.bf16.mxu0 0
    %930 = vmatpush1.bf16.msra.mxu0 0
    %931 = vmatprep.subr.bf16.mxu0 0
    %932 = vmatpush1.bf16.msra.mxu0 0
    %933 = vmatprep.subr.bf16.mxu0 0
    %934 = vmatpush1.bf16.msra.mxu0 0
    %935 = vmatprep.subr.bf16.mxu0 0
    %936 = vmatpush1.bf16.msra.mxu0 0
    %937 = vmatprep.subr.bf16.mxu0 0
    %938 = vmatpush1.bf16.msra.mxu0 0
    %939 = vmatprep.subr.bf16.mxu0 0
    %940 = vmatpush1.bf16.msra.mxu0 0
    %941 = vmatprep.subr.bf16.mxu0 0
    %942 = vmatpush1.bf16.msra.mxu0 0
    %943 = vmatprep.subr.bf16.mxu0 0
    %944 = vmatpush1.bf16.msra.mxu0 0
    %945 = vmatprep.subr.bf16.mxu0 0
    %946 = vmatpush1.bf16.msra.mxu0 0
    %947 = vmatprep.mubr.bf16.mxu0 0
    %948 = vmatmul.mubr.bf16.gmra.mrb[0].mxu0 %v910
    %v949 = vpop.f32.mrb[0].mxu0
    %v950 = vadd.f32 0.0, %v949
    %v951 = vpop.f32.mrb[0].mxu0
    %v952 = vpop.f32.mrb[0].mxu0
    %v953 = vadd.f32 0.0, %v952
    %v954 = vpop.f32.mrb[0].mxu0
    %955 = vmatprep.mubr.bf16.mxu0 0
    %956 = vmatmul.mubr.bf16.gmra.mrb[0].mxu0 %v913
    %v957 = vpop.f32.mrb[0].mxu0
    %v958 = vadd.f32 0.0, %v957
    %v959 = vpop.f32.mrb[0].mxu0
    %v960 = vpop.f32.mrb[0].mxu0
    %v961 = vadd.f32 0.0, %v960
    %v962 = vpop.f32.mrb[0].mxu0
    %963 = vdwg.mxu0
    %v964 = vpack.c.bf16 %v953, %v950
    %v965 = vpack.c.bf16 %v961, %v958
    %966 = vmatprep.subr.bf16.mxu0 0
    %967 = vmatpush1.bf16.msra.mxu0 %v964
    %968 = vmatprep.subr.bf16.mxu0 0
    %969 = vmatpush1.bf16.msra.mxu0 %v965
    %970 = vmatprep.subr.bf16.mxu0 0
    %971 = vmatpush1.bf16.msra.mxu0 0
    %972 = vmatprep.subr.bf16.mxu0 0
    %973 = vmatpush1.bf16.msra.mxu0 0
    %974 = vmatprep.subr.bf16.mxu0 0
    %975 = vmatpush1.bf16.msra.mxu0 0
    %976 = vmatprep.subr.bf16.mxu0 0
    %977 = vmatpush1.bf16.msra.mxu0 0
    %978 = vmatprep.subr.bf16.mxu0 0
    %979 = vmatpush1.bf16.msra.mxu0 0
    %980 = vmatprep.subr.bf16.mxu0 0
    %981 = vmatpush1.bf16.msra.mxu0 0
    %982 = vmatprep.subr.bf16.mxu0 0
    %983 = vmatpush1.bf16.msra.mxu0 0
    %984 = vmatprep.subr.bf16.mxu0 0
    %985 = vmatpush1.bf16.msra.mxu0 0
    %986 = vmatprep.subr.bf16.mxu0 0
    %987 = vmatpush1.bf16.msra.mxu0 0
    %988 = vmatprep.subr.bf16.mxu0 0
    %989 = vmatpush1.bf16.msra.mxu0 0
    %990 = vmatprep.subr.bf16.mxu0 0
    %991 = vmatpush1.bf16.msra.mxu0 0
    %992 = vmatprep.subr.bf16.mxu0 0
    %993 = vmatpush1.bf16.msra.mxu0 0
    %994 = vmatprep.subr.bf16.mxu0 0
    %995 = vmatpush1.bf16.msra.mxu0 0
    %996 = vmatprep.subr.bf16.mxu0 0
    %997 = vmatpush1.bf16.msra.mxu0 0
    %998 = vmatprep.mubr.bf16.mxu0 0
    %999 = vmatmul.mubr.bf16.gmra.mrb[0].mxu0 %v370
    %v1000 = vpop.f32.mrb[0].mxu0
    %v1001 = vadd.f32 0.0, %v1000
    %v1002 = vpop.f32.mrb[0].mxu0
    %v1003 = vpop.f32.mrb[0].mxu0
    %v1004 = vadd.f32 0.0, %v1003
    %v1005 = vpop.f32.mrb[0].mxu0
    %1006 = vmatprep.mubr.bf16.mxu0 0
    %1007 = vmatmul.mubr.bf16.gmra.mrb[0].mxu0 %v373
    %v1008 = vpop.f32.mrb[0].mxu0
    %v1009 = vadd.f32 0.0, %v1008
    %v1010 = vpop.f32.mrb[0].mxu0
    %v1011 = vpop.f32.mrb[0].mxu0
    %v1012 = vadd.f32 0.0, %v1011
    %v1013 = vpop.f32.mrb[0].mxu0
    %1014 = vdwg.mxu0
    %vm1015 = vcmask 818176
    %v1016 = vsel %vm1015, %v1001, 0.0
    %v1017 = vsel %vm1015, %v1004, 0.0
    %v1018 = vadd.f32 %v1016, %v1017
    %v1019 = vsel %vm1015, %v1009, 0.0
    %v1020 = vadd.f32 %v1018, %v1019
    %v1021 = vsel %vm1015, %v1012, 0.0
    %v1022 = vadd.f32 %v1020, %v1021
    %v1023 = vrot.slane %v1022, 4
    %v1024 = vadd.f32 %v1022, %v1023
    %v1025 = vrot.slane %v1024, 2
    %v1026 = vadd.f32 %v1024, %v1025
    %v1027 = vrot.slane %v1026, 1
    %v1028 = vadd.f32 %v1026, %v1027
    %v1029 = vmul.f32 %v1028, 0.03125
    %v1030 = vsub.f32 %v1001, %v1029
    %v1031 = vsub.f32 %v1004, %v1029
    %v1032 = vsub.f32 %v1009, %v1029
    %v1033 = vsub.f32 %v1012, %v1029
    %v1034 = vmul.f32 %v1030, %v1030
    %v1035 = vmul.f32 %v1031, %v1031
    %v1036 = vmul.f32 %v1032, %v1032
    %v1037 = vmul.f32 %v1033, %v1033
    %v1038 = vsel %vm1015, %v1034, 0.0
    %v1039 = vsel %vm1015, %v1035, 0.0
    %v1040 = vadd.f32 %v1038, %v1039
    %v1041 = vsel %vm1015, %v1036, 0.0
    %v1042 = vadd.f32 %v1040, %v1041
    %v1043 = vsel %vm1015, %v1037, 0.0
    %v1044 = vadd.f32 %v1042, %v1043
    %v1045 = vrot.slane %v1044, 4
    %v1046 = vadd.f32 %v1044, %v1045
    %v1047 = vrot.slane %v1046, 2
    %v1048 = vadd.f32 %v1046, %v1047
    %v1049 = vrot.slane %v1048, 1
    %v1050 = vadd.f32 %v1048, %v1049
    %v1051 = vmul.f32 %v1050, 0.03125
    %v1052 = vadd.f32 %v1051, 1e-05
    %v1053 = vrsqrt.pop %v1052
    %v1054 = vmul.f32 %v1030, %v1053
    %v1055 = vmul.f32 %v1031, %v1053
    %v1056 = vmul.f32 %v1032, %v1053
    %v1057 = vmul.f32 %v1033, %v1053
    %v1058 = vld [vmem:[%s15] sm:$0x1]
    %v1060 = vlaneseq
    %v1061 = vshrl.u32 %v1060, 7
    %v1062 = vsub.s32 0, %v1061
    %v1063 = vrot.slane %v1058, %v1062
    %v1065 = vmul.f32 %v1054, %v1063
    %v1066 = vmul.f32 %v1055, %v1063
    %v1067 = vmul.f32 %v1056, %v1063
    %v1068 = vmul.f32 %v1057, %v1063
    %v1069 = vld [vmem:[%s16] sm:$0x1]
    %v1071 = vlaneseq
    %v1072 = vshrl.u32 %v1071, 7
    %v1073 = vsub.s32 0, %v1072
    %v1074 = vrot.slane %v1069, %v1073
    %v1076 = vadd.f32 %v1065, %v1074
    %v1077 = vadd.f32 %v1066, %v1074
    %v1078 = vadd.f32 %v1067, %v1074
    %v1079 = vadd.f32 %v1068, %v1074
    %vm1080 = vcmp.gt.f32.partialorder %v1076, 0.0
    %vm1081 = vcmp.gt.f32.partialorder %v1077, 0.0
    %vm1082 = vcmp.gt.f32.partialorder %v1078, 0.0
    %vm1083 = vcmp.gt.f32.partialorder %v1079, 0.0
    %v1084 = vmin.f32 %v1076, 0.0
    %v1085 = vmin.f32 %v1077, 0.0
    %v1086 = vmin.f32 %v1078, 0.0
    %v1087 = vmin.f32 %v1079, 0.0
    %v1088 = vmul.f32 %v1084, 1.442695
    %v1089 = vpow.pop %v1088
    %v1090 = vmul.f32 %v1085, 1.442695
    %v1091 = vpow.pop %v1090
    %v1092 = vmul.f32 %v1086, 1.442695
    %v1093 = vpow.pop %v1092
    %v1094 = vmul.f32 %v1087, 1.442695
    %v1095 = vpow.pop %v1094
    %v1096 = vsub.f32 %v1089, 1.0
    %v1097 = vsub.f32 %v1091, 1.0
    %v1098 = vsub.f32 %v1093, 1.0
    %v1099 = vsub.f32 %v1095, 1.0
    %v1100 = vsel %vm1080, %v1076, %v1096
    %v1101 = vsel %vm1081, %v1077, %v1097
    %v1102 = vsel %vm1082, %v1078, %v1098
    %v1103 = vsel %vm1083, %v1079, %v1099
    %v1104 = vpack.c.bf16 %v1101, %v1100
    %v1105 = vpack.c.bf16 %v1103, %v1102
    %1106 = vmatprep.subr.bf16.mxu0 0
    %1107 = vmatpush1.bf16.msra.mxu0 %v1104
    %1108 = vmatprep.subr.bf16.mxu0 0
    %1109 = vmatpush1.bf16.msra.mxu0 %v1105
    %1110 = vmatprep.subr.bf16.mxu0 0
    %1111 = vmatpush1.bf16.msra.mxu0 0
    %1112 = vmatprep.subr.bf16.mxu0 0
    %1113 = vmatpush1.bf16.msra.mxu0 0
    %1114 = vmatprep.subr.bf16.mxu0 0
    %1115 = vmatpush1.bf16.msra.mxu0 0
    %1116 = vmatprep.subr.bf16.mxu0 0
    %1117 = vmatpush1.bf16.msra.mxu0 0
    %1118 = vmatprep.subr.bf16.mxu0 0
    %1119 = vmatpush1.bf16.msra.mxu0 0
    %1120 = vmatprep.subr.bf16.mxu0 0
    %1121 = vmatpush1.bf16.msra.mxu0 0
    %1122 = vmatprep.subr.bf16.mxu0 0
    %1123 = vmatpush1.bf16.msra.mxu0 0
    %1124 = vmatprep.subr.bf16.mxu0 0
    %1125 = vmatpush1.bf16.msra.mxu0 0
    %1126 = vmatprep.subr.bf16.mxu0 0
    %1127 = vmatpush1.bf16.msra.mxu0 0
    %1128 = vmatprep.subr.bf16.mxu0 0
    %1129 = vmatpush1.bf16.msra.mxu0 0
    %1130 = vmatprep.subr.bf16.mxu0 0
    %1131 = vmatpush1.bf16.msra.mxu0 0
    %1132 = vmatprep.subr.bf16.mxu0 0
    %1133 = vmatpush1.bf16.msra.mxu0 0
    %1134 = vmatprep.subr.bf16.mxu0 0
    %1135 = vmatpush1.bf16.msra.mxu0 0
    %1136 = vmatprep.subr.bf16.mxu0 0
    %1137 = vmatpush1.bf16.msra.mxu0 0
    %1138 = vmatprep.mubr.bf16.mxu0 0
    %1139 = vmatmul.mubr.bf16.gmra.mrb[0].mxu0 %v515
    %v1140 = vpop.f32.mrb[0].mxu0
    %v1141 = vadd.f32 0.0, %v1140
    %v1142 = vpop.f32.mrb[0].mxu0
    %v1143 = vpop.f32.mrb[0].mxu0
    %v1144 = vpop.f32.mrb[0].mxu0
    %1145 = vdwg.mxu0
    %v1146 = vpack.c.bf16 %v1141, %v1141
    %v1147 = vld [vmem:[%s17] sm:$0xff]
    %v1148 = vld [vmem:[%s17 + $0x8] sm:$0xff]
    %v1149 = vld [vmem:[%s17 + $0x10] sm:$0xff]
    %v1150 = vld [vmem:[%s17 + $0x18] sm:$0xff]
    %v1151 = vld [vmem:[%s17 + $0x20] sm:$0xff]
    %v1152 = vld [vmem:[%s17 + $0x28] sm:$0xff]
    %v1153 = vld [vmem:[%s17 + $0x30] sm:$0xff]
    %v1154 = vld [vmem:[%s17 + $0x38] sm:$0xff]
    %v1155 = vld [vmem:[%s17 + $0x40] sm:$0xff]
    %v1156 = vld [vmem:[%s17 + $0x48] sm:$0xff]
    %v1157 = vld [vmem:[%s17 + $0x50] sm:$0xff]
    %v1158 = vld [vmem:[%s17 + $0x58] sm:$0xff]
    %v1159 = vld [vmem:[%s17 + $0x60] sm:$0xf]
    %v1160 = vpack.c.bf16 %v1148, %v1147
    %v1161 = vpack.c.bf16 %v1150, %v1149
    %v1162 = vpack.c.bf16 %v1152, %v1151
    %v1163 = vpack.c.bf16 %v1154, %v1153
    %v1164 = vpack.c.bf16 %v1156, %v1155
    %v1165 = vpack.c.bf16 %v1158, %v1157
    %v1166 = vpack.c.bf16 %v1159, %v1159
    %v1168 = vsel %vm1015, %v1146, 0
    %vm1170 = vcmask 1041408
    %v1172 = vsel %vm1170, %v1166, 0
    %1174 = vmatprep.subr.bf16.mxu0 0
    %1175 = vmatpush1.bf16.msra.mxu0 %v1160
    %1176 = vmatprep.subr.bf16.mxu0 0
    %1177 = vmatpush1.bf16.msra.mxu0 %v1161
    %1178 = vmatprep.subr.bf16.mxu0 0
    %1179 = vmatpush1.bf16.msra.mxu0 %v1162
    %1180 = vmatprep.subr.bf16.mxu0 0
    %1181 = vmatpush1.bf16.msra.mxu0 %v1163
    %1182 = vmatprep.subr.bf16.mxu0 0
    %1183 = vmatpush1.bf16.msra.mxu0 %v1164
    %1184 = vmatprep.subr.bf16.mxu0 0
    %1185 = vmatpush1.bf16.msra.mxu0 %v1165
    %1186 = vmatprep.subr.bf16.mxu0 0
    %1187 = vmatpush1.bf16.msra.mxu0 %v1172
    %1188 = vmatprep.subr.bf16.mxu0 0
    %1189 = vmatpush1.bf16.msra.mxu0 0
    %1190 = vmatprep.subr.bf16.mxu0 0
    %1191 = vmatpush1.bf16.msra.mxu0 0
    %1192 = vmatprep.subr.bf16.mxu0 0
    %1193 = vmatpush1.bf16.msra.mxu0 0
    %1194 = vmatprep.subr.bf16.mxu0 0
    %1195 = vmatpush1.bf16.msra.mxu0 0
    %1196 = vmatprep.subr.bf16.mxu0 0
    %1197 = vmatpush1.bf16.msra.mxu0 0
    %1198 = vmatprep.subr.bf16.mxu0 0
    %1199 = vmatpush1.bf16.msra.mxu0 0
    %1200 = vmatprep.subr.bf16.mxu0 0
    %1201 = vmatpush1.bf16.msra.mxu0 0
    %1202 = vmatprep.subr.bf16.mxu0 0
    %1203 = vmatpush1.bf16.msra.mxu0 0
    %1204 = vmatprep.subr.bf16.mxu0 0
    %1205 = vmatpush1.bf16.msra.mxu0 0
    %1206 = vmatprep.mubr.bf16.mxu0 0
    %1207 = vmatmul.mubr.bf16.gmra.mrb[0].mxu0 %v1168
    %v1208 = vpop.f32.mrb[0].mxu0
    %v1209 = vadd.f32 0.0, %v1208
    %v1210 = vpop.f32.mrb[0].mxu0
    %v1211 = vpop.f32.mrb[0].mxu0
    %v1212 = vpop.f32.mrb[0].mxu0
    %1213 = vdwg.mxu0
    %v1214 = vadd.f32 %v898, %v1209
    %v1215 = vld [vmem:[%s18] sm:$0x1]
    %v1217 = vlaneseq
    %v1218 = vshrl.u32 %v1217, 7
    %v1219 = vsub.s32 0, %v1218
    %v1220 = vrot.slane %v1215, %v1219
    %v1222 = vadd.f32 %v1214, %v1220
    %v1223 = vmax.f32 %v1222, 0.0
    %v1224 = vpack.c.bf16 %v1223, %v1223
    %v1225 = vld [vmem:[%s19] sm:$0xff]
    %v1226 = vld [vmem:[%s19 + $0x8] sm:$0xff]
    %v1227 = vpack.c.bf16 %v1226, %v1225
    %v1228 = vld [vmem:[%s20] sm:$0x1]
    %v1230 = vlaneseq
    %v1231 = vshrl.u32 %v1230, 7
    %v1232 = vsub.s32 0, %v1231
    %v1233 = vrot.slane %v1228, %v1232
    %v1236 = vsel %vm91, %v1224, 0
    %1238 = vmatprep.subr.bf16.mxu0 0
    %1239 = vmatpush1.bf16.msra.mxu0 %v1227
    %1240 = vmatprep.subr.bf16.mxu0 0
    %1241 = vmatpush1.bf16.msra.mxu0 0
    %1242 = vmatprep.subr.bf16.mxu0 0
    %1243 = vmatpush1.bf16.msra.mxu0 0
    %1244 = vmatprep.subr.bf16.mxu0 0
    %1245 = vmatpush1.bf16.msra.mxu0 0
    %1246 = vmatprep.subr.bf16.mxu0 0
    %1247 = vmatpush1.bf16.msra.mxu0 0
    %1248 = vmatprep.subr.bf16.mxu0 0
    %1249 = vmatpush1.bf16.msra.mxu0 0
    %1250 = vmatprep.subr.bf16.mxu0 0
    %1251 = vmatpush1.bf16.msra.mxu0 0
    %1252 = vmatprep.subr.bf16.mxu0 0
    %1253 = vmatpush1.bf16.msra.mxu0 0
    %1254 = vmatprep.subr.bf16.mxu0 0
    %1255 = vmatpush1.bf16.msra.mxu0 0
    %1256 = vmatprep.subr.bf16.mxu0 0
    %1257 = vmatpush1.bf16.msra.mxu0 0
    %1258 = vmatprep.subr.bf16.mxu0 0
    %1259 = vmatpush1.bf16.msra.mxu0 0
    %1260 = vmatprep.subr.bf16.mxu0 0
    %1261 = vmatpush1.bf16.msra.mxu0 0
    %1262 = vmatprep.subr.bf16.mxu0 0
    %1263 = vmatpush1.bf16.msra.mxu0 0
    %1264 = vmatprep.subr.bf16.mxu0 0
    %1265 = vmatpush1.bf16.msra.mxu0 0
    %1266 = vmatprep.subr.bf16.mxu0 0
    %1267 = vmatpush1.bf16.msra.mxu0 0
    %1268 = vmatprep.subr.bf16.mxu0 0
    %1269 = vmatpush1.bf16.msra.mxu0 0
    %1270 = vmatprep.mubr.bf16.mxu0 0
    %1271 = vmatmul.mubr.bf16.gmra.mrb[0].mxu0 %v1236
    %v1272 = vpop.f32.mrb[0].mxu0
    %v1273 = vadd.f32 %v1233, %v1272
    %v1274 = vpop.f32.mrb[0].mxu0
    %v1275 = vpop.f32.mrb[0].mxu0
    %v1276 = vpop.f32.mrb[0].mxu0
    %1277 = vdwg.mxu0
    %1278 = vst [vmem:[#allocation2] sm:$0x3] %v1273
    // Predicated region
    $region86: #{gcn_forward.3} parent=1 // pred_check
      _
    $region87: #{gcn_forward.3} parent=1 // pred_check_branch
      %1280 = sbr.rel (0) target = $region89
    $region88: #{gcn_forward.3} parent=1 // pred_region
      %s1282 = ssub.s32 32, 32
      %1283 = vsyncadd [#allocation3], %s1282
      %s1285 = sshll.u32 [#allocation2], 4
      %s1286 = int_to_ptr.vmem [resolvable:$true] %s1285
      %1288 = dma.vmem_to_hbm [thread:$0]  %s1286, 32, %s21, [#allocation3]
    $region89: #{gcn_forward.3} parent=1 // pred_fallthru
      _
    // Predicated region
    $region90: #{gcn_forward.3} parent=1 // pred_check
      _
    $region91: #{gcn_forward.3} parent=1 // pred_check_branch
      %1290 = sbr.rel (0) target = $region93
    $region92: #{gcn_forward.3} parent=1 // pred_region
      %1291 = dma.done [#allocation3], 32
    $region93: #{gcn_forward.3} parent=1 // pred_fallthru
      _
    %1292 = vsyncpa [#allocation3], 1

</llo_original>
